<compile_context>
chip_gen: v6e
topology: v6e:2x2x1
jax: 0.10.0
libtpu: 0.0.40
codegen_flags: <defaults>
</compile_context>

<pallas_src>
import jax
import jax.numpy as jnp
import numpy as np
from jax import lax
from jax.experimental import pallas as pl
from jax.experimental.pallas import tpu as pltpu


# ------------------------------- small helpers ------------------------------

def _ceil_to(n, m):
    return -(-n // m) * m


def _pick_tile_ho(Ho, Wo, per_out_row_bytes, budget_bytes, max_pixels=8192):
    """Largest divisor of Ho whose (double-buffered) output tile fits the budget."""
    best = 1
    for d in range(1, Ho + 1):
        if Ho % d == 0 and d * per_out_row_bytes <= budget_bytes and d * Wo <= max_pixels:
            best = d
    return best


def _pick_sub_ho(tile_ho, Wo, Wp, C_in, stride, reg_budget=44):
    """Largest divisor of tile_ho whose slab + accumulator stay under ~44 vregs."""
    lane_tiles = -(-C_in // 128)
    best = 1
    for s in range(1, tile_ho + 1):
        if tile_ho % s:
            continue
        rows = (s - 1) * stride + 1
        regs = (s * (-(-Wo // 8)) + rows * (-(-Wp // 8))) * lane_tiles
        if regs <= reg_budget:
            best = s
    return best


# ------------------------------- fused kernel -------------------------------

def _make_dilconv_kernel(ks, dil, pad, stride, tile_ho, sub_ho,
                         H, W, Wo, C_in, C_outp, mxu_dtype):
    """One grid step = one (batch element, tile of output rows).
      x_ref    : (H, W, C_in)              unpadded input image (batch squeezed)
      wdw_ref  : (ks*ks, C_in)             depthwise taps (f32)
      wpw_ref  : (C_in, C_outp)            pointwise weights (bf16, lane-padded)
      o_ref    : (tile_ho, Wo, C_outp)     output row tile (lane-dense)
      xpad_ref : (H+2p, W+2p, C_in)        VMEM scratch, persists across row tiles
    """
    Hp, Wp = H + 2 * pad, W + 2 * pad
    n_chunks = tile_ho // sub_ho
    rows_needed = (sub_ho - 1) * stride + 1

    def kernel(x_ref, wdw_ref, wpw_ref, o_ref, xpad_ref):
        t = pl.program_id(1)

        # Fill the padded-image scratch once per batch element.  The row-tile
        # axis is the innermost, sequentially executed ("arbitrary") grid axis,
        # so the scratch persists across the remaining row tiles of this batch
        # element.  Only the four border strips are zeroed (no full-scratch fill).
        @pl.when(t == 0)
        def _():
            if pad > 0:
                zrow = jnp.zeros((pad, Wp, C_in), xpad_ref.dtype)
                xpad_ref[0:pad, :, :] = zrow
                xpad_ref[pad + H:Hp, :, :] = zrow
                zcol = jnp.zeros((H, pad, C_in), xpad_ref.dtype)
                xpad_ref[pad:pad + H, 0:pad, :] = zcol
                xpad_ref[pad:pad + H, pad + W:Wp, :] = zcol
            xpad_ref[pad:pad + H, pad:pad + W, :] = x_ref[...]

        wdw_all = wdw_ref[...].astype(jnp.float32)          # (ks*ks, C_in), tiny
        wpw = wpw_ref[...]                                   # (C_in, C_outp), bf16

        row_tile0 = t * tile_ho                              # first output row of tile

        # Process the row tile in vreg-bounded sub-chunks: depthwise taps on the
        # VPU with an f32 accumulator, then one MXU matmul per chunk (bf16
        # operands, f32 accumulation) feeding a lane-dense store.
        for c in range(n_chunks):
            out_r0 = c * sub_ho                              # static within-tile offset
            acc = jnp.zeros((sub_ho, Wo, C_in), jnp.float32)
            for dy in range(ks):
                in_r0 = (row_tile0 + out_r0) * stride + dy * dil
                # One full-width slab load per dy (k streams instead of k*k).
                slab = xpad_ref[pl.ds(in_r0, rows_needed), :, :]
                if stride > 1:
                    slab = slab[::stride]                    # decimate rows in-register
                slab = slab.astype(jnp.float32)              # (sub_ho, Wp, C_in)
                for dx in range(ks):
                    cs = dx * dil
                    if stride == 1:
                        win = slab[:, cs:cs + Wo, :]
                    else:
                        win = slab[:, cs:cs + (Wo - 1) * stride + 1:stride, :]
                    tap = wdw_all[dy * ks + dx:dy * ks + dx + 1, :]      # (1, C_in)
                    acc = acc + win * tap

            mm = jnp.dot(acc.reshape(sub_ho * Wo, C_in).astype(mxu_dtype), wpw,
                         preferred_element_type=jnp.float32)
            o_ref[out_r0:out_r0 + sub_ho, :, :] = (
                mm.reshape(sub_ho, Wo, C_outp).astype(o_ref.dtype))

    return kernel


# ------------------------------ forward wrapper ------------------------------

def dilconv_forward(x_nchw, w_dw, w_pw, *, kernel_size, stride, padding, dilation,
                    mxu_dtype=jnp.bfloat16):
    """DilConv forward.  x: (B, C_in, H, W) NCHW; torch weight layouts:
    w_dw: (C_in, 1, k, k) depthwise, w_pw: (C_out, C_in, 1, 1) pointwise."""
    B, C_in, H, W = x_nchw.shape
    C_out = w_pw.shape[0]
    ks, d, p, s = kernel_size, dilation, padding, stride
    Ho = (H + 2 * p - d * (ks - 1) - 1) // s + 1
    Wo = (W + 2 * p - d * (ks - 1) - 1) // s + 1
    Hp, Wp = H + 2 * p, W + 2 * p

    # Lane-dense output: pad C_out up to a multiple of 128 so the output block's
    # last dim is full-lane (unmasked vst); padded channels sliced off after.
    C_outp = _ceil_to(C_out, 128)

    # NHWC activations, (k*k, C_in) depthwise taps, (C_in, C_outp) bf16 pointwise.
    x = jnp.transpose(x_nchw, (0, 2, 3, 1))
    wdw = jnp.transpose(w_dw[:, 0, :, :], (1, 2, 0)).reshape(ks * ks, C_in)
    wpw = jnp.transpose(w_pw[:, :, 0, 0], (1, 0)).astype(mxu_dtype)
    if C_outp != C_out:
        wpw = jnp.pad(wpw, ((0, 0), (0, C_outp - C_out)))

    # VMEM budget from the actual chip (v5e/v6e 128 MiB, v7x 64 MiB per TC).
    try:
        phys_vmem = int(getattr(pltpu.get_tpu_info(), "vmem_capacity_bytes", 0))
    except Exception:
        phys_vmem = 0
    if phys_vmem <= 0:
        phys_vmem = 64 * 1024 * 1024                      # conservative (v7x) fallback
    vmem_limit = max(32 * 1024 * 1024, min(phys_vmem * 3 // 4, 100 * 1024 * 1024))

    # Resident-set estimate (physical sublane/lane padding included) so the
    # row-tile choice cannot blow VMEM on tall feature maps.
    bpe = np.dtype(x.dtype).itemsize
    c_lanes = _ceil_to(C_in, 128)
    fixed_bytes = (2 * H * _ceil_to(W, 8) * c_lanes * bpe            # input block (dbl-buffered)
                   + Hp * _ceil_to(Wp, 8) * c_lanes * bpe            # padded-image scratch
                   + 2 * _ceil_to(ks * ks, 8) * c_lanes * 4          # depthwise taps
                   + 2 * _ceil_to(C_in, 8) * C_outp * np.dtype(mxu_dtype).itemsize)
    per_out_row = 2 * _ceil_to(Wo, 8) * C_outp * bpe                 # output rows (dbl-buffered)
    budget = max(vmem_limit - fixed_bytes - (4 << 20), 0)

    tile_ho = _pick_tile_ho(Ho, Wo, per_out_row, budget)
    sub_ho = _pick_sub_ho(tile_ho, Wo, Wp, C_in, s)
    n_row_tiles = Ho // tile_ho

    kernel = _make_dilconv_kernel(ks, d, p, s, tile_ho, sub_ho,
                                  H, W, Wo, C_in, C_outp, mxu_dtype)

    out_nhwc = pl.pallas_call(
        kernel,
        out_shape=jax.ShapeDtypeStruct((B, Ho, Wo, C_outp), x.dtype),
        grid=(B, n_row_tiles),
        in_specs=[
            # Full image of one batch element; index map is constant over the
            # row-tile axis so the block stays resident (no re-DMA per tile).
            pl.BlockSpec((None, H, W, C_in), lambda b, t: (b, 0, 0, 0)),
            pl.BlockSpec((ks * ks, C_in), lambda b, t: (0, 0)),
            pl.BlockSpec((C_in, C_outp), lambda b, t: (0, 0)),
        ],
        out_specs=pl.BlockSpec((None, tile_ho, Wo, C_outp),
                               lambda b, t: (b, t, 0, 0)),
        scratch_shapes=[pltpu.VMEM((Hp, Wp, C_in), x.dtype)],
        compiler_params=pltpu.CompilerParams(
            dimension_semantics=("parallel", "arbitrary"),
            vmem_limit_bytes=int(vmem_limit)),
    )(x, wdw, wpw)

    if C_outp != C_out:
        out_nhwc = out_nhwc[..., :C_out]
    return jnp.transpose(out_nhwc, (0, 3, 1, 2))                     # NCHW


# ----------------------------- pure-JAX reference ----------------------------

def reference_forward(x, w_dw, w_pw, *, stride, padding, dilation):
    dn = ("NCHW", "OIHW", "NCHW")
    hp = lax.Precision.HIGHEST
    C_in = x.shape[1]
    y = lax.conv_general_dilated(
        x, w_dw, (stride, stride), ((padding, padding), (padding, padding)),
        rhs_dilation=(dilation, dilation), dimension_numbers=dn,
        feature_group_count=C_in, precision=hp)
    y = lax.conv_general_dilated(
        y, w_pw, (1, 1), "VALID", dimension_numbers=dn, precision=hp)
    return y


# ---------------------------------- main -------------------------------------

if __name__ == "__main__":
    B, C_in, C_out, H, W = 2, 16, 32, 16, 16
    kernel_size, stride, padding, dilation = 3, 1, 2, 2   # classic dilated 3x3

    key = jax.random.PRNGKey(0)
    k1, k2, k3 = jax.random.split(key, 3)
    x = jax.random.normal(k1, (B, C_in, H, W), jnp.float32)
    w_dw = 0.1 * jax.random.normal(k2, (C_in, 1, kernel_size, kernel_size), jnp.float32)
    w_pw = 0.1 * jax.random.normal(k3, (C_out, C_in, 1, 1), jnp.float32)

    out = dilconv_forward(x, w_dw, w_pw, kernel_size=kernel_size, stride=stride,
                          padding=padding, dilation=dilation)
    out = jax.block_until_ready(out)

    ref = reference_forward(x, w_dw, w_pw, stride=stride, padding=padding,
                            dilation=dilation)
    assert out.shape == ref.shape == (B, C_out, H, W)
    err = float(jnp.max(jnp.abs(out - ref)))
    # bf16 MXU operands for the 1x1 projection -> slightly looser tolerance.
    assert jnp.allclose(out, ref, atol=2e-2, rtol=2e-2), err
    print("KERNEL_OK")
</pallas_src>

<mosaic_0001>
module attributes {stable_mosaic.version = 11 : i64} {
  func.func @kernel(%arg0: i32, %arg1: i32, %arg2: memref<1x16x16x16xf32, #tpu.memory_space<vmem>>, %arg3: memref<9x16xf32, #tpu.memory_space<vmem>>, %arg4: memref<16x128xbf16, #tpu.memory_space<vmem>>, %arg5: memref<1x16x16x128xf32, #tpu.memory_space<vmem>>, %arg6: memref<20x20x16xf32, #tpu.memory_space<vmem>>) attributes {dimension_semantics = [#tpu.dimension_semantics<parallel>, #tpu.dimension_semantics<arbitrary>], iteration_bounds = array<i64: 2, 1>, scalar_prefetch = 0 : i64, scratch_operands = 1 : i64, tpu.core_type = #tpu.core_type<tc>, window_params = [{transform_indices = @transform_0, window_bounds = array<i64: 1, 16, 16, 16>}, {pipeline_mode = #tpu.pipeline_mode<synchronous>, transform_indices = @transform_1, window_bounds = array<i64: 9, 16>}, {pipeline_mode = #tpu.pipeline_mode<synchronous>, transform_indices = @transform_2, window_bounds = array<i64: 16, 128>}, {transform_indices = @transform_3, window_bounds = array<i64: 1, 16, 16, 128>}]} {
    %c0_i32 = arith.constant 0 : i32
    %0 = arith.cmpi eq, %arg1, %c0_i32 : i32
    %1 = arith.extui %0 : i1 to i32
    %c0_i32_0 = arith.constant 0 : i32
    %2 = arith.cmpi ne, %1, %c0_i32_0 : i32
    scf.if %2 {
      %cst_40 = arith.constant 0.000000e+00 : f32
      %160 = vector.broadcast %cst_40 : f32 to vector<2x20x16xf32>
      %c0_41 = arith.constant 0 : index
      %c0_42 = arith.constant 0 : index
      %c0_43 = arith.constant 0 : index
      %161 = vector.load %arg6[%c0_41, %c0_42, %c0_43] : memref<20x20x16xf32, #tpu.memory_space<vmem>>, vector<2x20x16xf32>
      tpu.vector_store %arg6[%c0_41, %c0_42, %c0_43], %160 {strides = array<i32>} : memref<20x20x16xf32, #tpu.memory_space<vmem>>, vector<2x20x16xf32>,
      %c18 = arith.constant 18 : index
      %c0_44 = arith.constant 0 : index
      %c0_45 = arith.constant 0 : index
      %162 = vector.load %arg6[%c18, %c0_44, %c0_45] : memref<20x20x16xf32, #tpu.memory_space<vmem>>, vector<2x20x16xf32>
      tpu.vector_store %arg6[%c18, %c0_44, %c0_45], %160 {strides = array<i32>} : memref<20x20x16xf32, #tpu.memory_space<vmem>>, vector<2x20x16xf32>,
      %cst_46 = arith.constant 0.000000e+00 : f32
      %163 = vector.broadcast %cst_46 : f32 to vector<16x2x16xf32>
      %c2 = arith.constant 2 : index
      %c0_47 = arith.constant 0 : index
      %c0_48 = arith.constant 0 : index
      %164 = vector.load %arg6[%c2, %c0_47, %c0_48] : memref<20x20x16xf32, #tpu.memory_space<vmem>>, vector<16x2x16xf32>
      tpu.vector_store %arg6[%c2, %c0_47, %c0_48], %163 {strides = array<i32>} : memref<20x20x16xf32, #tpu.memory_space<vmem>>, vector<16x2x16xf32>,
      %c2_49 = arith.constant 2 : index
      %c18_50 = arith.constant 18 : index
      %c0_51 = arith.constant 0 : index
      %165 = vector.load %arg6[%c2_49, %c18_50, %c0_51] : memref<20x20x16xf32, #tpu.memory_space<vmem>>, vector<16x2x16xf32>
      tpu.vector_store %arg6[%c2_49, %c18_50, %c0_51], %163 {strides = array<i32>} : memref<20x20x16xf32, #tpu.memory_space<vmem>>, vector<16x2x16xf32>,
      %c0_52 = arith.constant 0 : index
      %c0_53 = arith.constant 0 : index
      %c0_54 = arith.constant 0 : index
      %c0_55 = arith.constant 0 : index
      %166 = vector.load %arg2[%c0_52, %c0_53, %c0_54, %c0_55] : memref<1x16x16x16xf32, #tpu.memory_space<vmem>>, vector<1x16x16x16xf32>
      %167 = vector.shape_cast %166 : vector<1x16x16x16xf32> to vector<16x16x16xf32>
      %c2_56 = arith.constant 2 : index
      %c2_57 = arith.constant 2 : index
      %c0_58 = arith.constant 0 : index
      %168 = vector.load %arg6[%c2_56, %c2_57, %c0_58] : memref<20x20x16xf32, #tpu.memory_space<vmem>>, vector<16x16x16xf32>
      tpu.vector_store %arg6[%c2_56, %c2_57, %c0_58], %167 {strides = array<i32>} : memref<20x20x16xf32, #tpu.memory_space<vmem>>, vector<16x16x16xf32>,
    } else {
    }
    %c0 = arith.constant 0 : index
    %c0_1 = arith.constant 0 : index
    %3 = vector.load %arg3[%c0, %c0_1] : memref<9x16xf32, #tpu.memory_space<vmem>>, vector<9x16xf32>
    %c0_2 = arith.constant 0 : index
    %c0_3 = arith.constant 0 : index
    %4 = vector.load %arg4[%c0_2, %c0_3] : memref<16x128xbf16, #tpu.memory_space<vmem>>, vector<16x128xbf16>
    %c16_i32 = arith.constant 16 : i32
    %5 = arith.muli %arg1, %c16_i32 : i32
    %cst = arith.constant 0.000000e+00 : f32
    %6 = vector.broadcast %cst : f32 to vector<8x16x16xf32>
    %c0_i32_4 = arith.constant 0 : i32
    %7 = arith.addi %5, %c0_i32_4 : i32
    %c1_i32 = arith.constant 1 : i32
    %8 = arith.muli %7, %c1_i32 : i32
    %c0_i32_5 = arith.constant 0 : i32
    %9 = arith.addi %8, %c0_i32_5 : i32
    %10 = arith.index_cast %9 : i32 to index
    %c0_6 = arith.constant 0 : index
    %c0_7 = arith.constant 0 : index
    %11 = vector.load %arg6[%10, %c0_6, %c0_7] : memref<20x20x16xf32, #tpu.memory_space<vmem>>, vector<8x20x16xf32>
    %12 = vector.extract_strided_slice %11 {offsets = [0, 0, 0], sizes = [8, 16, 16], strides = [1, 1, 1]} : vector<8x20x16xf32> to vector<8x16x16xf32>
    %13 = vector.extract_strided_slice %3 {offsets = [0, 0], sizes = [1, 16], strides = [1, 1]} : vector<9x16xf32> to vector<1x16xf32>
    %14 = vector.shape_cast %13 : vector<1x16xf32> to vector<1x1x16xf32>
    %15 = vector.broadcast %14 : vector<1x1x16xf32> to vector<8x16x16xf32>
    %16 = arith.mulf %12, %15 : vector<8x16x16xf32>
    %17 = arith.addf %6, %16 : vector<8x16x16xf32>
    %18 = vector.extract_strided_slice %11 {offsets = [0, 2, 0], sizes = [8, 16, 16], strides = [1, 1, 1]} : vector<8x20x16xf32> to vector<8x16x16xf32>
    %19 = vector.extract_strided_slice %3 {offsets = [1, 0], sizes = [1, 16], strides = [1, 1]} : vector<9x16xf32> to vector<1x16xf32>
    %20 = vector.shape_cast %19 : vector<1x16xf32> to vector<1x1x16xf32>
    %21 = vector.broadcast %20 : vector<1x1x16xf32> to vector<8x16x16xf32>
    %22 = arith.mulf %18, %21 : vector<8x16x16xf32>
    %23 = arith.addf %17, %22 : vector<8x16x16xf32>
    %24 = vector.extract_strided_slice %11 {offsets = [0, 4, 0], sizes = [8, 16, 16], strides = [1, 1, 1]} : vector<8x20x16xf32> to vector<8x16x16xf32>
    %25 = vector.extract_strided_slice %3 {offsets = [2, 0], sizes = [1, 16], strides = [1, 1]} : vector<9x16xf32> to vector<1x16xf32>
    %26 = vector.shape_cast %25 : vector<1x16xf32> to vector<1x1x16xf32>
    %27 = vector.broadcast %26 : vector<1x1x16xf32> to vector<8x16x16xf32>
    %28 = arith.mulf %24, %27 : vector<8x16x16xf32>
    %29 = arith.addf %23, %28 : vector<8x16x16xf32>
    %c0_i32_8 = arith.constant 0 : i32
    %30 = arith.addi %5, %c0_i32_8 : i32
    %c1_i32_9 = arith.constant 1 : i32
    %31 = arith.muli %30, %c1_i32_9 : i32
    %c2_i32 = arith.constant 2 : i32
    %32 = arith.addi %31, %c2_i32 : i32
    %33 = arith.index_cast %32 : i32 to index
    %c0_10 = arith.constant 0 : index
    %c0_11 = arith.constant 0 : index
    %34 = vector.load %arg6[%33, %c0_10, %c0_11] : memref<20x20x16xf32, #tpu.memory_space<vmem>>, vector<8x20x16xf32>
    %35 = vector.extract_strided_slice %34 {offsets = [0, 0, 0], sizes = [8, 16, 16], strides = [1, 1, 1]} : vector<8x20x16xf32> to vector<8x16x16xf32>
    %36 = vector.extract_strided_slice %3 {offsets = [3, 0], sizes = [1, 16], strides = [1, 1]} : vector<9x16xf32> to vector<1x16xf32>
    %37 = vector.shape_cast %36 : vector<1x16xf32> to vector<1x1x16xf32>
    %38 = vector.broadcast %37 : vector<1x1x16xf32> to vector<8x16x16xf32>
    %39 = arith.mulf %35, %38 : vector<8x16x16xf32>
    %40 = arith.addf %29, %39 : vector<8x16x16xf32>
    %41 = vector.extract_strided_slice %34 {offsets = [0, 2, 0], sizes = [8, 16, 16], strides = [1, 1, 1]} : vector<8x20x16xf32> to vector<8x16x16xf32>
    %42 = vector.extract_strided_slice %3 {offsets = [4, 0], sizes = [1, 16], strides = [1, 1]} : vector<9x16xf32> to vector<1x16xf32>
    %43 = vector.shape_cast %42 : vector<1x16xf32> to vector<1x1x16xf32>
    %44 = vector.broadcast %43 : vector<1x1x16xf32> to vector<8x16x16xf32>
    %45 = arith.mulf %41, %44 : vector<8x16x16xf32>
    %46 = arith.addf %40, %45 : vector<8x16x16xf32>
    %47 = vector.extract_strided_slice %34 {offsets = [0, 4, 0], sizes = [8, 16, 16], strides = [1, 1, 1]} : vector<8x20x16xf32> to vector<8x16x16xf32>
    %48 = vector.extract_strided_slice %3 {offsets = [5, 0], sizes = [1, 16], strides = [1, 1]} : vector<9x16xf32> to vector<1x16xf32>
    %49 = vector.shape_cast %48 : vector<1x16xf32> to vector<1x1x16xf32>
    %50 = vector.broadcast %49 : vector<1x1x16xf32> to vector<8x16x16xf32>
    %51 = arith.mulf %47, %50 : vector<8x16x16xf32>
    %52 = arith.addf %46, %51 : vector<8x16x16xf32>
    %c0_i32_12 = arith.constant 0 : i32
    %53 = arith.addi %5, %c0_i32_12 : i32
    %c1_i32_13 = arith.constant 1 : i32
    %54 = arith.muli %53, %c1_i32_13 : i32
    %c4_i32 = arith.constant 4 : i32
    %55 = arith.addi %54, %c4_i32 : i32
    %56 = arith.index_cast %55 : i32 to index
    %c0_14 = arith.constant 0 : index
    %c0_15 = arith.constant 0 : index
    %57 = vector.load %arg6[%56, %c0_14, %c0_15] : memref<20x20x16xf32, #tpu.memory_space<vmem>>, vector<8x20x16xf32>
    %58 = vector.extract_strided_slice %57 {offsets = [0, 0, 0], sizes = [8, 16, 16], strides = [1, 1, 1]} : vector<8x20x16xf32> to vector<8x16x16xf32>
    %59 = vector.extract_strided_slice %3 {offsets = [6, 0], sizes = [1, 16], strides = [1, 1]} : vector<9x16xf32> to vector<1x16xf32>
    %60 = vector.shape_cast %59 : vector<1x16xf32> to vector<1x1x16xf32>
    %61 = vector.broadcast %60 : vector<1x1x16xf32> to vector<8x16x16xf32>
    %62 = arith.mulf %58, %61 : vector<8x16x16xf32>
    %63 = arith.addf %52, %62 : vector<8x16x16xf32>
    %64 = vector.extract_strided_slice %57 {offsets = [0, 2, 0], sizes = [8, 16, 16], strides = [1, 1, 1]} : vector<8x20x16xf32> to vector<8x16x16xf32>
    %65 = vector.extract_strided_slice %3 {offsets = [7, 0], sizes = [1, 16], strides = [1, 1]} : vector<9x16xf32> to vector<1x16xf32>
    %66 = vector.shape_cast %65 : vector<1x16xf32> to vector<1x1x16xf32>
    %67 = vector.broadcast %66 : vector<1x1x16xf32> to vector<8x16x16xf32>
    %68 = arith.mulf %64, %67 : vector<8x16x16xf32>
    %69 = arith.addf %63, %68 : vector<8x16x16xf32>
    %70 = vector.extract_strided_slice %57 {offsets = [0, 4, 0], sizes = [8, 16, 16], strides = [1, 1, 1]} : vector<8x20x16xf32> to vector<8x16x16xf32>
    %71 = vector.extract_strided_slice %3 {offsets = [8, 0], sizes = [1, 16], strides = [1, 1]} : vector<9x16xf32> to vector<1x16xf32>
    %72 = vector.shape_cast %71 : vector<1x16xf32> to vector<1x1x16xf32>
    %73 = vector.broadcast %72 : vector<1x1x16xf32> to vector<8x16x16xf32>
    %74 = arith.mulf %70, %73 : vector<8x16x16xf32>
    %75 = arith.addf %69, %74 : vector<8x16x16xf32>
    %76 = vector.shape_cast %75 : vector<8x16x16xf32> to vector<128x16xf32>
    %77 = arith.truncf %76 : vector<128x16xf32> to vector<128x16xbf16>
    %cst_16 = arith.constant dense<0.000000e+00> : vector<128x128xf32>
    %78 = tpu.matmul %77, %4, %cst_16 {dimension_numbers = #tpu.dot_dimension_numbers<[1], [0], [0], [1], [0, 0, 1, 1], [], []>} : vector<128x16xbf16>, vector<16x128xbf16>, vector<128x128xf32> -> vector<128x128xf32>
    %79 = vector.shape_cast %78 : vector<128x128xf32> to vector<8x16x128xf32>
    %c0_17 = arith.constant 0 : index
    %c0_18 = arith.constant 0 : index
    %c0_19 = arith.constant 0 : index
    %c0_20 = arith.constant 0 : index
    %80 = vector.load %arg5[%c0_17, %c0_18, %c0_19, %c0_20] : memref<1x16x16x128xf32, #tpu.memory_space<vmem>>, vector<1x8x16x128xf32>
    %81 = vector.shape_cast %80 : vector<1x8x16x128xf32> to vector<8x16x128xf32>
    %82 = vector.shape_cast %79 : vector<8x16x128xf32> to vector<1x8x16x128xf32>
    tpu.vector_store %arg5[%c0_17, %c0_18, %c0_19, %c0_20], %82 {strides = array<i32>} : memref<1x16x16x128xf32, #tpu.memory_space<vmem>>, vector<1x8x16x128xf32>,
    %cst_21 = arith.constant 0.000000e+00 : f32
    %83 = vector.broadcast %cst_21 : f32 to vector<8x16x16xf32>
    %c8_i32 = arith.constant 8 : i32
    %84 = arith.addi %5, %c8_i32 : i32
    %c1_i32_22 = arith.constant 1 : i32
    %85 = arith.muli %84, %c1_i32_22 : i32
    %c0_i32_23 = arith.constant 0 : i32
    %86 = arith.addi %85, %c0_i32_23 : i32
    %87 = arith.index_cast %86 : i32 to index
    %c0_24 = arith.constant 0 : index
    %c0_25 = arith.constant 0 : index
    %88 = vector.load %arg6[%87, %c0_24, %c0_25] : memref<20x20x16xf32, #tpu.memory_space<vmem>>, vector<8x20x16xf32>
    %89 = vector.extract_strided_slice %88 {offsets = [0, 0, 0], sizes = [8, 16, 16], strides = [1, 1, 1]} : vector<8x20x16xf32> to vector<8x16x16xf32>
    %90 = vector.extract_strided_slice %3 {offsets = [0, 0], sizes = [1, 16], strides = [1, 1]} : vector<9x16xf32> to vector<1x16xf32>
    %91 = vector.shape_cast %90 : vector<1x16xf32> to vector<1x1x16xf32>
    %92 = vector.broadcast %91 : vector<1x1x16xf32> to vector<8x16x16xf32>
    %93 = arith.mulf %89, %92 : vector<8x16x16xf32>
    %94 = arith.addf %83, %93 : vector<8x16x16xf32>
    %95 = vector.extract_strided_slice %88 {offsets = [0, 2, 0], sizes = [8, 16, 16], strides = [1, 1, 1]} : vector<8x20x16xf32> to vector<8x16x16xf32>
    %96 = vector.extract_strided_slice %3 {offsets = [1, 0], sizes = [1, 16], strides = [1, 1]} : vector<9x16xf32> to vector<1x16xf32>
    %97 = vector.shape_cast %96 : vector<1x16xf32> to vector<1x1x16xf32>
    %98 = vector.broadcast %97 : vector<1x1x16xf32> to vector<8x16x16xf32>
    %99 = arith.mulf %95, %98 : vector<8x16x16xf32>
    %100 = arith.addf %94, %99 : vector<8x16x16xf32>
    %101 = vector.extract_strided_slice %88 {offsets = [0, 4, 0], sizes = [8, 16, 16], strides = [1, 1, 1]} : vector<8x20x16xf32> to vector<8x16x16xf32>
    %102 = vector.extract_strided_slice %3 {offsets = [2, 0], sizes = [1, 16], strides = [1, 1]} : vector<9x16xf32> to vector<1x16xf32>
    %103 = vector.shape_cast %102 : vector<1x16xf32> to vector<1x1x16xf32>
    %104 = vector.broadcast %103 : vector<1x1x16xf32> to vector<8x16x16xf32>
    %105 = arith.mulf %101, %104 : vector<8x16x16xf32>
    %106 = arith.addf %100, %105 : vector<8x16x16xf32>
    %c8_i32_26 = arith.constant 8 : i32
    %107 = arith.addi %5, %c8_i32_26 : i32
    %c1_i32_27 = arith.constant 1 : i32
    %108 = arith.muli %107, %c1_i32_27 : i32
    %c2_i32_28 = arith.constant 2 : i32
    %109 = arith.addi %108, %c2_i32_28 : i32
    %110 = arith.index_cast %109 : i32 to index
    %c0_29 = arith.constant 0 : index
    %c0_30 = arith.constant 0 : index
    %111 = vector.load %arg6[%110, %c0_29, %c0_30] : memref<20x20x16xf32, #tpu.memory_space<vmem>>, vector<8x20x16xf32>
    %112 = vector.extract_strided_slice %111 {offsets = [0, 0, 0], sizes = [8, 16, 16], strides = [1, 1, 1]} : vector<8x20x16xf32> to vector<8x16x16xf32>
    %113 = vector.extract_strided_slice %3 {offsets = [3, 0], sizes = [1, 16], strides = [1, 1]} : vector<9x16xf32> to vector<1x16xf32>
    %114 = vector.shape_cast %113 : vector<1x16xf32> to vector<1x1x16xf32>
    %115 = vector.broadcast %114 : vector<1x1x16xf32> to vector<8x16x16xf32>
    %116 = arith.mulf %112, %115 : vector<8x16x16xf32>
    %117 = arith.addf %106, %116 : vector<8x16x16xf32>
    %118 = vector.extract_strided_slice %111 {offsets = [0, 2, 0], sizes = [8, 16, 16], strides = [1, 1, 1]} : vector<8x20x16xf32> to vector<8x16x16xf32>
    %119 = vector.extract_strided_slice %3 {offsets = [4, 0], sizes = [1, 16], strides = [1, 1]} : vector<9x16xf32> to vector<1x16xf32>
    %120 = vector.shape_cast %119 : vector<1x16xf32> to vector<1x1x16xf32>
    %121 = vector.broadcast %120 : vector<1x1x16xf32> to vector<8x16x16xf32>
    %122 = arith.mulf %118, %121 : vector<8x16x16xf32>
    %123 = arith.addf %117, %122 : vector<8x16x16xf32>
    %124 = vector.extract_strided_slice %111 {offsets = [0, 4, 0], sizes = [8, 16, 16], strides = [1, 1, 1]} : vector<8x20x16xf32> to vector<8x16x16xf32>
    %125 = vector.extract_strided_slice %3 {offsets = [5, 0], sizes = [1, 16], strides = [1, 1]} : vector<9x16xf32> to vector<1x16xf32>
    %126 = vector.shape_cast %125 : vector<1x16xf32> to vector<1x1x16xf32>
    %127 = vector.broadcast %126 : vector<1x1x16xf32> to vector<8x16x16xf32>
    %128 = arith.mulf %124, %127 : vector<8x16x16xf32>
    %129 = arith.addf %123, %128 : vector<8x16x16xf32>
    %c8_i32_31 = arith.constant 8 : i32
    %130 = arith.addi %5, %c8_i32_31 : i32
    %c1_i32_32 = arith.constant 1 : i32
    %131 = arith.muli %130, %c1_i32_32 : i32
    %c4_i32_33 = arith.constant 4 : i32
    %132 = arith.addi %131, %c4_i32_33 : i32
    %133 = arith.index_cast %132 : i32 to index
    %c0_34 = arith.constant 0 : index
    %c0_35 = arith.constant 0 : index
    %134 = vector.load %arg6[%133, %c0_34, %c0_35] : memref<20x20x16xf32, #tpu.memory_space<vmem>>, vector<8x20x16xf32>
    %135 = vector.extract_strided_slice %134 {offsets = [0, 0, 0], sizes = [8, 16, 16], strides = [1, 1, 1]} : vector<8x20x16xf32> to vector<8x16x16xf32>
    %136 = vector.extract_strided_slice %3 {offsets = [6, 0], sizes = [1, 16], strides = [1, 1]} : vector<9x16xf32> to vector<1x16xf32>
    %137 = vector.shape_cast %136 : vector<1x16xf32> to vector<1x1x16xf32>
    %138 = vector.broadcast %137 : vector<1x1x16xf32> to vector<8x16x16xf32>
    %139 = arith.mulf %135, %138 : vector<8x16x16xf32>
    %140 = arith.addf %129, %139 : vector<8x16x16xf32>
    %141 = vector.extract_strided_slice %134 {offsets = [0, 2, 0], sizes = [8, 16, 16], strides = [1, 1, 1]} : vector<8x20x16xf32> to vector<8x16x16xf32>
    %142 = vector.extract_strided_slice %3 {offsets = [7, 0], sizes = [1, 16], strides = [1, 1]} : vector<9x16xf32> to vector<1x16xf32>
    %143 = vector.shape_cast %142 : vector<1x16xf32> to vector<1x1x16xf32>
    %144 = vector.broadcast %143 : vector<1x1x16xf32> to vector<8x16x16xf32>
    %145 = arith.mulf %141, %144 : vector<8x16x16xf32>
    %146 = arith.addf %140, %145 : vector<8x16x16xf32>
    %147 = vector.extract_strided_slice %134 {offsets = [0, 4, 0], sizes = [8, 16, 16], strides = [1, 1, 1]} : vector<8x20x16xf32> to vector<8x16x16xf32>
    %148 = vector.extract_strided_slice %3 {offsets = [8, 0], sizes = [1, 16], strides = [1, 1]} : vector<9x16xf32> to vector<1x16xf32>
    %149 = vector.shape_cast %148 : vector<1x16xf32> to vector<1x1x16xf32>
    %150 = vector.broadcast %149 : vector<1x1x16xf32> to vector<8x16x16xf32>
    %151 = arith.mulf %147, %150 : vector<8x16x16xf32>
    %152 = arith.addf %146, %151 : vector<8x16x16xf32>
    %153 = vector.shape_cast %152 : vector<8x16x16xf32> to vector<128x16xf32>
    %154 = arith.truncf %153 : vector<128x16xf32> to vector<128x16xbf16>
    %cst_36 = arith.constant dense<0.000000e+00> : vector<128x128xf32>
    %155 = tpu.matmul %154, %4, %cst_36 {dimension_numbers = #tpu.dot_dimension_numbers<[1], [0], [0], [1], [0, 0, 1, 1], [], []>} : vector<128x16xbf16>, vector<16x128xbf16>, vector<128x128xf32> -> vector<128x128xf32>
    %156 = vector.shape_cast %155 : vector<128x128xf32> to vector<8x16x128xf32>
    %c0_37 = arith.constant 0 : index
    %c8 = arith.constant 8 : index
    %c0_38 = arith.constant 0 : index
    %c0_39 = arith.constant 0 : index
    %157 = vector.load %arg5[%c0_37, %c8, %c0_38, %c0_39] : memref<1x16x16x128xf32, #tpu.memory_space<vmem>>, vector<1x8x16x128xf32>
    %158 = vector.shape_cast %157 : vector<1x8x16x128xf32> to vector<8x16x128xf32>
    %159 = vector.shape_cast %156 : vector<8x16x128xf32> to vector<1x8x16x128xf32>
    tpu.vector_store %arg5[%c0_37, %c8, %c0_38, %c0_39], %159 {strides = array<i32>} : memref<1x16x16x128xf32, #tpu.memory_space<vmem>>, vector<1x8x16x128xf32>,
    return
  }
  func.func @transform_0(%arg0: i32, %arg1: i32) -> (i32, i32, i32, i32) {
    %c0_i32 = arith.constant 0 : i32
    %c0_i32_0 = arith.constant 0 : i32
    %c0_i32_1 = arith.constant 0 : i32
    %c0_i32_2 = arith.constant 0 : i32
    return %arg0, %c0_i32, %c0_i32_0, %c0_i32_1 : i32, i32, i32, i32
  }
  func.func @transform_1(%arg0: i32, %arg1: i32) -> (i32, i32) {
    %c0_i32 = arith.constant 0 : i32
    %c0_i32_0 = arith.constant 0 : i32
    %c0_i32_1 = arith.constant 0 : i32
    return %c0_i32, %c0_i32_0 : i32, i32
  }
  func.func @transform_2(%arg0: i32, %arg1: i32) -> (i32, i32) {
    %c0_i32 = arith.constant 0 : i32
    %c0_i32_0 = arith.constant 0 : i32
    %c0_i32_1 = arith.constant 0 : i32
    return %c0_i32, %c0_i32_0 : i32, i32
  }
  func.func @transform_3(%arg0: i32, %arg1: i32) -> (i32, i32, i32, i32) {
    %c0_i32 = arith.constant 0 : i32
    %c0_i32_0 = arith.constant 0 : i32
    %c0_i32_1 = arith.constant 0 : i32
    return %arg0, %arg1, %c0_i32, %c0_i32_0 : i32, i32, i32, i32
  }
}

</mosaic_0001>

<llo_original>
// kernel: tpu_custom_call.1
$region0: #{tpu_custom_call.1}
  #allocation0 [shape = 'u32[]', space=smem, size = 0x4, offset = 0x4, fixed_abs, tag = 'smem constant byte address 0x4 - core index']
  #allocation1 [shape = 'u32[144,128]{1,0:T(1,128)}', space=vmem, size = 0x12000, scoped, tag = 'internal scratch']
  #allocation2 [shape = 'f32[20,20,16]{2,1,0:T(8,128)}', space=vmem, size = 0x3c000, scoped, tag = 'scratch operand']
  %s0 = inlined_call_operand.hbm [shape: f32[2,16,16,16], index: 0, kind: input, shape index: {}]
  %s1 = inlined_call_operand.hbm [shape: f32[9,16], index: 1, kind: input, shape index: {}]
  %s2 = inlined_call_operand.hbm [shape: bf16[16,128], index: 2, kind: input, shape index: {}]
  %s3 = inlined_call_operand.hbm [shape: f32[2,16,16,128], index: 3, kind: output, shape index: {}]
  %s4 = sld [smem:[#allocation0]]
  $region61: #{tpu_custom_call.1} parent=0
    _
  %s6 = ssub.s32 1, %s4
  %s7 = scalar_select 0, %s6, %s4
  $region1: #{tpu_custom_call.1} parent=0
    #allocation3 [shape = 'u8[262144]{0}', space=vmem, size = 0x40000, scoped, tag = 'input window, operand 0']
    #allocation4 [shape = 's32[2]{0}', space=sflag, size = 0x8, scoped, tag = 'scoped memory for tpu_custom_call.1']
    #allocation5 [shape = 's32[2]{0}', space=sflag, size = 0x8, scoped, tag = 'scoped memory for tpu_custom_call.1']
    #allocation6 [shape = 'u8[8192]{0}', space=vmem, size = 0x2000, scoped, tag = 'input window, operand 1, single buffered']
    #allocation7 [shape = 's32[1]{0}', space=sflag, size = 0x4, scoped, tag = 'scoped memory for tpu_custom_call.1']
    #allocation8 [shape = 'u8[4096]{0}', space=vmem, size = 0x1000, scoped, tag = 'input window, operand 2, single buffered']
    #allocation9 [shape = 'u8[262144]{0}', space=vmem, size = 0x40000, scoped, tag = 'output window, operand 0']
    %8 = vsyncpa [#allocation4], 0
    %s9 = scalar_lea.sflag [#allocation4], 1
    %10 = vsyncpa %s9, 0
    %11 = vsyncpa [#allocation7], 0
    %12 = vsyncpa [#allocation5], 0
    %s13 = scalar_lea.sflag [#allocation5], 1
    %14 = vsyncpa %s13, 0
    loop: start=0, step=1, limit=4
    $region2: #{tpu_custom_call.1} parent=1 // loop_pre_header
      _
    $region3: #{tpu_custom_call.1} parent=1 // loop_header
      %s16 = sphi 0, %s20
      %p17 = scmp.ge.s32.totalorder %s16, 4
      %s23 = sphi 0, %s35
      %s24 = sphi 0, %s31
      %s25 = sphi 0, %s23
      %s26 = sphi 0, %s24
      %s27 = sphi 0, %s25
      %s28 = sphi 0, %s26
      %s38 = sphi 0, %s40
      %s41 = sphi 0, %s38
      %s42 = sphi 0, %s41
      %s58 = sphi 0, %s42
      %s62 = sphi 0, %s62
      %s64 = sphi 0, %s62
      %s65 = sphi 0, %s64
      %s79 = sphi 0, %s65
      %s83 = sphi 0, %s83
      %s85 = sphi 0, %s83
      %s86 = sphi 0, %s85
      %s100 = sphi 0, %s86
      %s108 = sphi 0, %s110
      %s111 = sphi 0, %s108
      %s112 = sphi 0, %s111
      %s128 = sphi 0, %s112
    $region4: #{tpu_custom_call.1} parent=1 // loop_header_branch
      %19 = sbr.rel (%p17) target = $region8
    $region5: #{tpu_custom_call.1} parent=1 // loop_body
      %s21 = ssub.s32 %s16, 1
      %s22 = ssub.s32 %s16, 2
      %s29 = sadd.s32 1, %s24
      %p30 = scmp.ge.s32.totalorder %s29, 1
      %s31 = scalar_select %p30, 0, %s29
      %s32 = sadd.s32 1, %s23
      %s33 = scalar_select %p30, %s32, %s23
      %p34 = scmp.ge.s32.totalorder %s33, 2
      %s35 = scalar_select %p34, 0, %s33
      %s36 = ssub.s32 %s23, %s35
      %p37 = scmp.eq.s32.totalorder %s36, 0
      %s39 = sadd.s32 %s38, 1
      %s40 = scalar_select %p37, %s38, %s39
      %p43 = pneg %p37
      %p44 = scmp.eq.s32.totalorder %s16, 1
      %p45 = por %p43, %p44
      %p46 = scmp.ne.s32.totalorder %s38, %s41
      %p47 = scmp.eq.s32.totalorder %s16, 0
      %p48 = por %p46, %p47
      %p49 = scmp.ne.s32.totalorder %s38, %s41
      %p50 = scmp.eq.s32.totalorder %s21, 1
      %p51 = por %p49, %p50
      %p52 = scmp.ne.s32.totalorder %s41, %s42
      %p53 = scmp.eq.s32.totalorder %s21, 0
      %p54 = por %p52, %p53
      %p55 = scmp.ne.s32.totalorder %s41, %s42
      %p56 = scmp.eq.s32.totalorder %s22, 1
      %p57 = por %p55, %p56
      %p59 = scmp.ne.s32.totalorder %s42, %s58
      %p60 = scmp.eq.s32.totalorder %s22, 0
      %p61 = por %p59, %p60
      %s63 = sadd.s32 %s62, 1
      %p66 = scmp.eq.s32.totalorder %s16, 1
      %p67 = scmp.ne.s32.totalorder %s62, %s64
      %p68 = scmp.eq.s32.totalorder %s16, 0
      %p69 = por %p67, %p68
      %p70 = scmp.ne.s32.totalorder %s62, %s64
      %p71 = scmp.eq.s32.totalorder %s21, 1
      %p72 = por %p70, %p71
      %p73 = scmp.ne.s32.totalorder %s64, %s65
      %p74 = scmp.eq.s32.totalorder %s21, 0
      %p75 = por %p73, %p74
      %p76 = scmp.ne.s32.totalorder %s64, %s65
      %p77 = scmp.eq.s32.totalorder %s22, 1
      %p78 = por %p76, %p77
      %p80 = scmp.ne.s32.totalorder %s65, %s79
      %p81 = scmp.eq.s32.totalorder %s22, 0
      %p82 = por %p80, %p81
      %s84 = sadd.s32 %s83, 1
      %p87 = scmp.eq.s32.totalorder %s16, 1
      %p88 = scmp.ne.s32.totalorder %s83, %s85
      %p89 = scmp.eq.s32.totalorder %s16, 0
      %p90 = por %p88, %p89
      %p91 = scmp.ne.s32.totalorder %s83, %s85
      %p92 = scmp.eq.s32.totalorder %s21, 1
      %p93 = por %p91, %p92
      %p94 = scmp.ne.s32.totalorder %s85, %s86
      %p95 = scmp.eq.s32.totalorder %s21, 0
      %p96 = por %p94, %p95
      %p97 = scmp.ne.s32.totalorder %s85, %s86
      %p98 = scmp.eq.s32.totalorder %s22, 1
      %p99 = por %p97, %p98
      %p101 = scmp.ne.s32.totalorder %s86, %s100
      %p102 = scmp.eq.s32.totalorder %s22, 0
      %p103 = por %p101, %p102
      %s104 = ssub.s32 %s23, %s35
      %s105 = ssub.s32 %s24, %s31
      %s106 = sor.u32 %s104, %s105
      %p107 = scmp.eq.s32.totalorder %s106, 0
      %s109 = sadd.s32 %s108, 1
      %s110 = scalar_select %p107, %s108, %s109
      %p113 = pneg %p107
      %p114 = scmp.eq.s32.totalorder %s16, 1
      %p115 = por %p113, %p114
      %p116 = scmp.ne.s32.totalorder %s108, %s111
      %p117 = scmp.eq.s32.totalorder %s16, 0
      %p118 = por %p116, %p117
      %p119 = scmp.ne.s32.totalorder %s108, %s111
      %p120 = scmp.eq.s32.totalorder %s21, 1
      %p121 = por %p119, %p120
      %p122 = scmp.ne.s32.totalorder %s111, %s112
      %p123 = scmp.eq.s32.totalorder %s21, 0
      %p124 = por %p122, %p123
      %p125 = scmp.ne.s32.totalorder %s111, %s112
      %p126 = scmp.eq.s32.totalorder %s22, 1
      %p127 = por %p125, %p126
      %p129 = scmp.ne.s32.totalorder %s112, %s128
      %p130 = scmp.eq.s32.totalorder %s22, 0
      %p131 = por %p129, %p130
      %p132 = scmp.le.s32.totalorder 1, %s16
      %p133 = scmp.lt.s32.totalorder %s16, 3
      %p134 = pnand %p132, %p133
      %p135 = pneg %p134
      // Predicated region
      $region9: #{tpu_custom_call.1} parent=5 // pred_check
        _
      $region10: #{tpu_custom_call.1} parent=5 // pred_check_branch
        %137 = sbr.rel (%p134) target = $region12
      $region11: #{tpu_custom_call.1} parent=5 // pred_region
        %s138 = ssub.s32 %s16, 1
        // Predicated region
        $region13: #{tpu_custom_call.1} parent=11 // pred_check
          %p139 = pneg %p75
        $region14: #{tpu_custom_call.1} parent=11 // pred_check_branch
          %141 = sbr.rel (%p139) target = $region16
        $region15: #{tpu_custom_call.1} parent=11 // pred_region
          %s143 = ssub.s32 256, 256
          %144 = vsyncadd [#allocation7], %s143
          %s145 = sshll.u32 [#allocation6], 4
          %s146 = int_to_ptr.vmem [resolvable:$true] %s145
          %151 = dma.hbm_to_vmem [thread:$0]  %s1, 256, %s146, [#allocation7], 128, 128, 8
        $region16: #{tpu_custom_call.1} parent=11 // pred_fallthru
          _
        // Predicated region
        $region17: #{tpu_custom_call.1} parent=11 // pred_check
          %p152 = pneg %p96
        $region18: #{tpu_custom_call.1} parent=11 // pred_check_branch
          %154 = sbr.rel (%p152) target = $region20
        $region19: #{tpu_custom_call.1} parent=11 // pred_region
          %s156 = ssub.s32 128, 128
          %157 = vsyncadd [#allocation7], %s156
          %s158 = sshll.u32 [#allocation8], 4
          %s159 = int_to_ptr.vmem [resolvable:$true] %s158
          %164 = dma.hbm_to_vmem [thread:$0]  %s2, 128, %s159, [#allocation7], 64, 64, 4
        $region20: #{tpu_custom_call.1} parent=11 // pred_fallthru
          _
      $region12: #{tpu_custom_call.1} parent=5 // pred_fallthru
        _
      %p165 = scmp.lt.s32.totalorder %s16, 2
      // Predicated region
      $region21: #{tpu_custom_call.1} parent=5 // pred_check
        %p166 = pneg %p165
      $region22: #{tpu_custom_call.1} parent=5 // pred_check_branch
        %168 = sbr.rel (%p166) target = $region24
      $region23: #{tpu_custom_call.1} parent=5 // pred_region
        // Predicated region
        $region25: #{tpu_custom_call.1} parent=23 // pred_check
          %p169 = pneg %p48
        $region26: #{tpu_custom_call.1} parent=23 // pred_check_branch
          %171 = sbr.rel (%p169) target = $region28
        $region27: #{tpu_custom_call.1} parent=23 // pred_region
          %s172 = sand.u32 %s38, 1
          %s173 = scalar_lea.sflag [#allocation4], %s172
          %s174 = sand.u32 %s38, 1
          %s175 = smul.addr %s174, 256
          %s176 = scalar_lea.vmem [#allocation3], %s175
          %s178 = ssub.s32 4096, 4096
          %179 = vsyncadd %s173, %s178
          %s180 = smul.addr %s23, 32
          %s181 = smul.addr %s180, 128
          %s182 = scalar_lea.hbm %s0, %s181
          %s183 = sshll.u32 %s176, 4
          %s184 = int_to_ptr.vmem [resolvable:$true] %s183
          %189 = dma.hbm_to_vmem [thread:$0]  %s182, 4096, %s184, %s173, 128, 128, 8
        $region28: #{tpu_custom_call.1} parent=23 // pred_fallthru
          _
      $region24: #{tpu_custom_call.1} parent=5 // pred_fallthru
        _
      %p190 = scmp.le.s32.totalorder 1, %s16
      %p191 = scmp.lt.s32.totalorder %s16, 3
      %p192 = pnand %p190, %p191
      %p193 = pneg %p192
      // Predicated region
      $region29: #{tpu_custom_call.1} parent=5 // pred_check
        _
      $region30: #{tpu_custom_call.1} parent=5 // pred_check_branch
        %195 = sbr.rel (%p192) target = $region32
      $region31: #{tpu_custom_call.1} parent=5 // pred_region
        %s196 = ssub.s32 %s16, 1
        %s197 = sand.u32 %s41, 1
        %s198 = scalar_lea.sflag [#allocation4], %s197
        %s199 = sand.u32 %s41, 1
        %s200 = smul.addr %s199, 256
        %s201 = scalar_lea.vmem [#allocation3], %s200
        // Predicated region
        $region33: #{tpu_custom_call.1} parent=31 // pred_check
          %p202 = pneg %p54
        $region34: #{tpu_custom_call.1} parent=31 // pred_check_branch
          %204 = sbr.rel (%p202) target = $region36
        $region35: #{tpu_custom_call.1} parent=31 // pred_region
          %205 = dma.done %s198, 4096
        $region36: #{tpu_custom_call.1} parent=31 // pred_fallthru
          _
        // Predicated region
        $region37: #{tpu_custom_call.1} parent=31 // pred_check
          %p206 = pneg %p75
        $region38: #{tpu_custom_call.1} parent=31 // pred_check_branch
          %208 = sbr.rel (%p206) target = $region40
        $region39: #{tpu_custom_call.1} parent=31 // pred_region
          %209 = dma.done [#allocation7], 256
        $region40: #{tpu_custom_call.1} parent=31 // pred_fallthru
          _
        // Predicated region
        $region41: #{tpu_custom_call.1} parent=31 // pred_check
          %p210 = pneg %p96
        $region42: #{tpu_custom_call.1} parent=31 // pred_check_branch
          %212 = sbr.rel (%p210) target = $region44
        $region43: #{tpu_custom_call.1} parent=31 // pred_region
          %213 = dma.done [#allocation7], 128
        $region44: #{tpu_custom_call.1} parent=31 // pred_fallthru
          _
        %s214 = sand.u32 %s41, 1
        %s215 = scalar_lea.sflag [#allocation4], %s214
        %s216 = sand.u32 %s41, 1
        %s217 = smul.addr %s216, 256
        %s218 = scalar_lea.vmem [#allocation3], %s217
        %p219 = pneg %p54
        %p220 = pneg %p51
        %p221 = pneg %p75
        %p222 = pneg %p72
        %p223 = pneg %p96
        %p224 = pneg %p93
        %p225 = pneg %p124
        %p226 = pneg %p121
        %s227 = sand.u32 %s111, 1
        %s228 = scalar_lea.sflag [#allocation5], %s227
        %s229 = sand.u32 %s111, 1
        %s230 = smul.addr %s229, 256
        %s231 = scalar_lea.vmem [#allocation9], %s230
        %s232 = smul.u32 16, %s26
        %p234 = scmp.eq.s32.totalorder %s26, 0
        // Predicated region
        $region45: #{tpu_custom_call.1} parent=31 // pred_check
          %p235 = pneg %p234
        $region46: #{tpu_custom_call.1} parent=31 // pred_check_branch
          %237 = sbr.rel (%p235) target = $region48
        $region47: #{tpu_custom_call.1} parent=31 // pred_region
          %vm238 = vcmask 130048
          %239 = vst.msk [vmem:[#allocation2] sm:$0xff] %vm238, 0.0
          %240 = vst.msk [vmem:[#allocation2 + $0x8] sm:$0xff] %vm238, 0.0
          %vm241 = vcmask 125952
          %242 = vst.msk [vmem:[#allocation2 + $0x10] sm:$0xf] %vm241, 0.0
          %243 = vst.msk [vmem:[#allocation2 + $0x18] sm:$0xff] %vm238, 0.0
          %244 = vst.msk [vmem:[#allocation2 + $0x20] sm:$0xff] %vm238, 0.0
          %245 = vst.msk [vmem:[#allocation2 + $0x28] sm:$0xf] %vm241, 0.0
          %s246 = scalar_lea.vmem [#allocation2], 432
          %247 = vst.msk [vmem:[%s246] sm:$0xff] %vm238, 0.0
          %248 = vst.msk [vmem:[%s246 + $0x8] sm:$0xff] %vm238, 0.0
          %249 = vst.msk [vmem:[%s246 + $0x10] sm:$0xf] %vm241, 0.0
          %250 = vst.msk [vmem:[%s246 + $0x18] sm:$0xff] %vm238, 0.0
          %251 = vst.msk [vmem:[%s246 + $0x20] sm:$0xff] %vm238, 0.0
          %252 = vst.msk [vmem:[%s246 + $0x28] sm:$0xf] %vm241, 0.0
          %s253 = scalar_lea.vmem [#allocation2], 48
          %vm254 = vcmask 123904
          %255 = vst.msk [vmem:[%s253] sm:$0x3] %vm254, 0.0
          %256 = vst.msk [vmem:[%s253 + $0x18] sm:$0x3] %vm254, 0.0
          %257 = vst.msk [vmem:[%s253 + $0x30] sm:$0x3] %vm254, 0.0
          %258 = vst.msk [vmem:[%s253 + $0x48] sm:$0x3] %vm254, 0.0
          %259 = vst.msk [vmem:[%s253 + $0x60] sm:$0x3] %vm254, 0.0
          %260 = vst.msk [vmem:[%s253 + $0x78] sm:$0x3] %vm254, 0.0
          %261 = vst.msk [vmem:[%s253 + $0x90] sm:$0x3] %vm254, 0.0
          %262 = vst.msk [vmem:[%s253 + $0xa8] sm:$0x3] %vm254, 0.0
          %263 = vst.msk [vmem:[%s253 + $0xc0] sm:$0x3] %vm254, 0.0
          %264 = vst.msk [vmem:[%s253 + $0xd8] sm:$0x3] %vm254, 0.0
          %265 = vst.msk [vmem:[%s253 + $0xf0] sm:$0x3] %vm254, 0.0
          %266 = vst.msk [vmem:[%s253 + $0x108] sm:$0x3] %vm254, 0.0
          %267 = vst.msk [vmem:[%s253 + $0x120] sm:$0x3] %vm254, 0.0
          %268 = vst.msk [vmem:[%s253 + $0x138] sm:$0x3] %vm254, 0.0
          %269 = vst.msk [vmem:[%s253 + $0x150] sm:$0x3] %vm254, 0.0
          %270 = vst.msk [vmem:[%s253 + $0x168] sm:$0x3] %vm254, 0.0
          %271 = vst.msk [vmem:[%s253 + $0x12] sm:$0x3] %vm254, 0.0
          %272 = vst.msk [vmem:[%s253 + $0x2a] sm:$0x3] %vm254, 0.0
          %273 = vst.msk [vmem:[%s253 + $0x42] sm:$0x3] %vm254, 0.0
          %274 = vst.msk [vmem:[%s253 + $0x5a] sm:$0x3] %vm254, 0.0
          %275 = vst.msk [vmem:[%s253 + $0x72] sm:$0x3] %vm254, 0.0
          %276 = vst.msk [vmem:[%s253 + $0x8a] sm:$0x3] %vm254, 0.0
          %277 = vst.msk [vmem:[%s253 + $0xa2] sm:$0x3] %vm254, 0.0
          %278 = vst.msk [vmem:[%s253 + $0xba] sm:$0x3] %vm254, 0.0
          %279 = vst.msk [vmem:[%s253 + $0xd2] sm:$0x3] %vm254, 0.0
          %280 = vst.msk [vmem:[%s253 + $0xea] sm:$0x3] %vm254, 0.0
          %281 = vst.msk [vmem:[%s253 + $0x102] sm:$0x3] %vm254, 0.0
          %282 = vst.msk [vmem:[%s253 + $0x11a] sm:$0x3] %vm254, 0.0
          %283 = vst.msk [vmem:[%s253 + $0x132] sm:$0x3] %vm254, 0.0
          %284 = vst.msk [vmem:[%s253 + $0x14a] sm:$0x3] %vm254, 0.0
          %285 = vst.msk [vmem:[%s253 + $0x162] sm:$0x3] %vm254, 0.0
          %286 = vst.msk [vmem:[%s253 + $0x17a] sm:$0x3] %vm254, 0.0
          %v287 = vld [vmem:[%s201] sm:$0xff]
          %v288 = vld [vmem:[%s201 + $0x8] sm:$0xff]
          %v289 = vld [vmem:[%s201 + $0x10] sm:$0xff]
          %v290 = vld [vmem:[%s201 + $0x18] sm:$0xff]
          %v291 = vld [vmem:[%s201 + $0x20] sm:$0xff]
          %v292 = vld [vmem:[%s201 + $0x28] sm:$0xff]
          %v293 = vld [vmem:[%s201 + $0x30] sm:$0xff]
          %v294 = vld [vmem:[%s201 + $0x38] sm:$0xff]
          %v295 = vld [vmem:[%s201 + $0x40] sm:$0xff]
          %v296 = vld [vmem:[%s201 + $0x48] sm:$0xff]
          %v297 = vld [vmem:[%s201 + $0x50] sm:$0xff]
          %v298 = vld [vmem:[%s201 + $0x58] sm:$0xff]
          %v299 = vld [vmem:[%s201 + $0x60] sm:$0xff]
          %v300 = vld [vmem:[%s201 + $0x68] sm:$0xff]
          %v301 = vld [vmem:[%s201 + $0x70] sm:$0xff]
          %v302 = vld [vmem:[%s201 + $0x78] sm:$0xff]
          %v303 = vld [vmem:[%s201 + $0x80] sm:$0xff]
          %v304 = vld [vmem:[%s201 + $0x88] sm:$0xff]
          %v305 = vld [vmem:[%s201 + $0x90] sm:$0xff]
          %v306 = vld [vmem:[%s201 + $0x98] sm:$0xff]
          %v307 = vld [vmem:[%s201 + $0xa0] sm:$0xff]
          %v308 = vld [vmem:[%s201 + $0xa8] sm:$0xff]
          %v309 = vld [vmem:[%s201 + $0xb0] sm:$0xff]
          %v310 = vld [vmem:[%s201 + $0xb8] sm:$0xff]
          %v311 = vld [vmem:[%s201 + $0xc0] sm:$0xff]
          %v312 = vld [vmem:[%s201 + $0xc8] sm:$0xff]
          %v313 = vld [vmem:[%s201 + $0xd0] sm:$0xff]
          %v314 = vld [vmem:[%s201 + $0xd8] sm:$0xff]
          %v315 = vld [vmem:[%s201 + $0xe0] sm:$0xff]
          %v316 = vld [vmem:[%s201 + $0xe8] sm:$0xff]
          %v317 = vld [vmem:[%s201 + $0xf0] sm:$0xff]
          %v318 = vld [vmem:[%s201 + $0xf8] sm:$0xff]
          %319 = vst.msk [vmem:[%s253 + $0x2] sm:$0xff] %vm238, %v287
          %320 = vst.msk [vmem:[%s253 + $0xa] sm:$0xff] %vm238, %v288
          %321 = vst.msk [vmem:[%s253 + $0x1a] sm:$0xff] %vm238, %v289
          %322 = vst.msk [vmem:[%s253 + $0x22] sm:$0xff] %vm238, %v290
          %323 = vst.msk [vmem:[%s253 + $0x32] sm:$0xff] %vm238, %v291
          %324 = vst.msk [vmem:[%s253 + $0x3a] sm:$0xff] %vm238, %v292
          %325 = vst.msk [vmem:[%s253 + $0x4a] sm:$0xff] %vm238, %v293
          %326 = vst.msk [vmem:[%s253 + $0x52] sm:$0xff] %vm238, %v294
          %327 = vst.msk [vmem:[%s253 + $0x62] sm:$0xff] %vm238, %v295
          %328 = vst.msk [vmem:[%s253 + $0x6a] sm:$0xff] %vm238, %v296
          %329 = vst.msk [vmem:[%s253 + $0x7a] sm:$0xff] %vm238, %v297
          %330 = vst.msk [vmem:[%s253 + $0x82] sm:$0xff] %vm238, %v298
          %331 = vst.msk [vmem:[%s253 + $0x92] sm:$0xff] %vm238, %v299
          %332 = vst.msk [vmem:[%s253 + $0x9a] sm:$0xff] %vm238, %v300
          %333 = vst.msk [vmem:[%s253 + $0xaa] sm:$0xff] %vm238, %v301
          %334 = vst.msk [vmem:[%s253 + $0xb2] sm:$0xff] %vm238, %v302
          %335 = vst.msk [vmem:[%s253 + $0xc2] sm:$0xff] %vm238, %v303
          %336 = vst.msk [vmem:[%s253 + $0xca] sm:$0xff] %vm238, %v304
          %337 = vst.msk [vmem:[%s253 + $0xda] sm:$0xff] %vm238, %v305
          %338 = vst.msk [vmem:[%s253 + $0xe2] sm:$0xff] %vm238, %v306
          %339 = vst.msk [vmem:[%s253 + $0xf2] sm:$0xff] %vm238, %v307
          %340 = vst.msk [vmem:[%s253 + $0xfa] sm:$0xff] %vm238, %v308
          %341 = vst.msk [vmem:[%s253 + $0x10a] sm:$0xff] %vm238, %v309
          %342 = vst.msk [vmem:[%s253 + $0x112] sm:$0xff] %vm238, %v310
          %343 = vst.msk [vmem:[%s253 + $0x122] sm:$0xff] %vm238, %v311
          %344 = vst.msk [vmem:[%s253 + $0x12a] sm:$0xff] %vm238, %v312
          %345 = vst.msk [vmem:[%s253 + $0x13a] sm:$0xff] %vm238, %v313
          %346 = vst.msk [vmem:[%s253 + $0x142] sm:$0xff] %vm238, %v314
          %347 = vst.msk [vmem:[%s253 + $0x152] sm:$0xff] %vm238, %v315
          %348 = vst.msk [vmem:[%s253 + $0x15a] sm:$0xff] %vm238, %v316
          %349 = vst.msk [vmem:[%s253 + $0x16a] sm:$0xff] %vm238, %v317
          %350 = vst.msk [vmem:[%s253 + $0x172] sm:$0xff] %vm238, %v318
        $region48: #{tpu_custom_call.1} parent=31 // pred_fallthru
          _
        %v351 = vld [vmem:[#allocation6] sm:$0xff]
        %v352 = vld [vmem:[#allocation6 + $0x8] sm:$0x1]
        %v353 = vld [vmem:[#allocation8] sm:$0xf]
        %v354 = vld [vmem:[#allocation8 + $0x4] sm:$0xf]
        %s355 = smul.u32 %s26, 16
        %s356 = smul.u32 %s355, 24
        %s357 = scalar_lea.vmem [#allocation2], %s356
        %v358 = vld [vmem:[%s357] sm:$0xff]
        %v359 = vld [vmem:[%s357 + $0x8] sm:$0xff]
        %v360 = vld [vmem:[%s357 + $0x10] sm:$0xf]
        %v361 = vld [vmem:[%s357 + $0x18] sm:$0xff]
        %v362 = vld [vmem:[%s357 + $0x20] sm:$0xff]
        %v363 = vld [vmem:[%s357 + $0x28] sm:$0xf]
        %v364 = vld [vmem:[%s357 + $0x30] sm:$0xff]
        %v365 = vld [vmem:[%s357 + $0x38] sm:$0xff]
        %v366 = vld [vmem:[%s357 + $0x40] sm:$0xf]
        %v367 = vld [vmem:[%s357 + $0x48] sm:$0xff]
        %v368 = vld [vmem:[%s357 + $0x50] sm:$0xff]
        %v369 = vld [vmem:[%s357 + $0x58] sm:$0xf]
        %v370 = vld [vmem:[%s357 + $0x60] sm:$0xff]
        %v371 = vld [vmem:[%s357 + $0x68] sm:$0xff]
        %v372 = vld [vmem:[%s357 + $0x70] sm:$0xf]
        %v373 = vld [vmem:[%s357 + $0x78] sm:$0xff]
        %v374 = vld [vmem:[%s357 + $0x80] sm:$0xff]
        %v375 = vld [vmem:[%s357 + $0x88] sm:$0xf]
        %v376 = vld [vmem:[%s357 + $0x90] sm:$0xff]
        %v377 = vld [vmem:[%s357 + $0x98] sm:$0xff]
        %v378 = vld [vmem:[%s357 + $0xa0] sm:$0xf]
        %v379 = vld [vmem:[%s357 + $0xa8] sm:$0xff]
        %v380 = vld [vmem:[%s357 + $0xb0] sm:$0xff]
        %v381 = vld [vmem:[%s357 + $0xb8] sm:$0xf]
        %v382 = vlaneseq
        %v383 = vshrl.u32 %v382, 7
        %v384 = vsub.s32 0, %v383
        %v385 = vrot.slane %v351, %v384
        %v386 = vmul.f32 %v358, %v385
        %v387 = vmul.f32 %v359, %v385
        %v388 = vmul.f32 %v361, %v385
        %v389 = vmul.f32 %v362, %v385
        %v390 = vmul.f32 %v364, %v385
        %v391 = vmul.f32 %v365, %v385
        %v392 = vmul.f32 %v367, %v385
        %v393 = vmul.f32 %v368, %v385
        %v394 = vmul.f32 %v370, %v385
        %v395 = vmul.f32 %v371, %v385
        %v396 = vmul.f32 %v373, %v385
        %v397 = vmul.f32 %v374, %v385
        %v398 = vmul.f32 %v376, %v385
        %v399 = vmul.f32 %v377, %v385
        %v400 = vmul.f32 %v379, %v385
        %v401 = vmul.f32 %v380, %v385
        %v402 = vadd.f32 %v386, 0.0
        %v403 = vadd.f32 %v387, 0.0
        %v404 = vadd.f32 %v388, 0.0
        %v405 = vadd.f32 %v389, 0.0
        %v406 = vadd.f32 %v390, 0.0
        %v407 = vadd.f32 %v391, 0.0
        %v408 = vadd.f32 %v392, 0.0
        %v409 = vadd.f32 %v393, 0.0
        %v410 = vadd.f32 %v394, 0.0
        %v411 = vadd.f32 %v395, 0.0
        %v412 = vadd.f32 %v396, 0.0
        %v413 = vadd.f32 %v397, 0.0
        %v414 = vadd.f32 %v398, 0.0
        %v415 = vadd.f32 %v399, 0.0
        %v416 = vadd.f32 %v400, 0.0
        %v417 = vadd.f32 %v401, 0.0
        %v418 = vlaneseq
        %v419 = vshrl.u32 %v418, 7
        %v420 = vsub.s32 1, %v419
        %v421 = vrot.slane %v351, %v420
        %v422 = vmul.f32 %v358, %v421
        %v423 = vmul.f32 %v359, %v421
        %v424 = vmul.f32 %v360, %v421
        %v425 = vmul.f32 %v361, %v421
        %v426 = vmul.f32 %v362, %v421
        %v427 = vmul.f32 %v363, %v421
        %v428 = vmul.f32 %v364, %v421
        %v429 = vmul.f32 %v365, %v421
        %v430 = vmul.f32 %v366, %v421
        %v431 = vmul.f32 %v367, %v421
        %v432 = vmul.f32 %v368, %v421
        %v433 = vmul.f32 %v369, %v421
        %v434 = vmul.f32 %v370, %v421
        %v435 = vmul.f32 %v371, %v421
        %v436 = vmul.f32 %v372, %v421
        %v437 = vmul.f32 %v373, %v421
        %v438 = vmul.f32 %v374, %v421
        %v439 = vmul.f32 %v375, %v421
        %v440 = vmul.f32 %v376, %v421
        %v441 = vmul.f32 %v377, %v421
        %v442 = vmul.f32 %v378, %v421
        %v443 = vmul.f32 %v379, %v421
        %v444 = vmul.f32 %v380, %v421
        %v445 = vmul.f32 %v381, %v421
        %vm470 = vcmask 1045504
        %v471 = vrot.slane %v422, 2
        %v472 = vrot.slane %v423, 2
        %v473 = vsel %vm470, %v471, %v472
        %v474 = vrot.slane %v424, 2
        %v475 = vsel %vm470, %v472, %v474
        %v476 = vrot.slane %v425, 2
        %v477 = vrot.slane %v426, 2
        %v478 = vsel %vm470, %v476, %v477
        %v479 = vrot.slane %v427, 2
        %v480 = vsel %vm470, %v477, %v479
        %v481 = vrot.slane %v428, 2
        %v482 = vrot.slane %v429, 2
        %v483 = vsel %vm470, %v481, %v482
        %v484 = vrot.slane %v430, 2
        %v485 = vsel %vm470, %v482, %v484
        %v486 = vrot.slane %v431, 2
        %v487 = vrot.slane %v432, 2
        %v488 = vsel %vm470, %v486, %v487
        %v489 = vrot.slane %v433, 2
        %v490 = vsel %vm470, %v487, %v489
        %v491 = vrot.slane %v434, 2
        %v492 = vrot.slane %v435, 2
        %v493 = vsel %vm470, %v491, %v492
        %v494 = vrot.slane %v436, 2
        %v495 = vsel %vm470, %v492, %v494
        %v496 = vrot.slane %v437, 2
        %v497 = vrot.slane %v438, 2
        %v498 = vsel %vm470, %v496, %v497
        %v499 = vrot.slane %v439, 2
        %v500 = vsel %vm470, %v497, %v499
        %v501 = vrot.slane %v440, 2
        %v502 = vrot.slane %v441, 2
        %v503 = vsel %vm470, %v501, %v502
        %v504 = vrot.slane %v442, 2
        %v505 = vsel %vm470, %v502, %v504
        %v506 = vrot.slane %v443, 2
        %v507 = vrot.slane %v444, 2
        %v508 = vsel %vm470, %v506, %v507
        %v509 = vrot.slane %v445, 2
        %v510 = vsel %vm470, %v507, %v509
        %v527 = vadd.f32 %v402, %v473
        %v528 = vadd.f32 %v403, %v475
        %v529 = vadd.f32 %v404, %v478
        %v530 = vadd.f32 %v405, %v480
        %v531 = vadd.f32 %v406, %v483
        %v532 = vadd.f32 %v407, %v485
        %v533 = vadd.f32 %v408, %v488
        %v534 = vadd.f32 %v409, %v490
        %v535 = vadd.f32 %v410, %v493
        %v536 = vadd.f32 %v411, %v495
        %v537 = vadd.f32 %v412, %v498
        %v538 = vadd.f32 %v413, %v500
        %v539 = vadd.f32 %v414, %v503
        %v540 = vadd.f32 %v415, %v505
        %v541 = vadd.f32 %v416, %v508
        %v542 = vadd.f32 %v417, %v510
        %v543 = vlaneseq
        %v544 = vshrl.u32 %v543, 7
        %v545 = vsub.s32 2, %v544
        %v546 = vrot.slane %v351, %v545
        %v547 = vmul.f32 %v358, %v546
        %v548 = vmul.f32 %v359, %v546
        %v549 = vmul.f32 %v360, %v546
        %v550 = vmul.f32 %v361, %v546
        %v551 = vmul.f32 %v362, %v546
        %v552 = vmul.f32 %v363, %v546
        %v553 = vmul.f32 %v364, %v546
        %v554 = vmul.f32 %v365, %v546
        %v555 = vmul.f32 %v366, %v546
        %v556 = vmul.f32 %v367, %v546
        %v557 = vmul.f32 %v368, %v546
        %v558 = vmul.f32 %v369, %v546
        %v559 = vmul.f32 %v370, %v546
        %v560 = vmul.f32 %v371, %v546
        %v561 = vmul.f32 %v372, %v546
        %v562 = vmul.f32 %v373, %v546
        %v563 = vmul.f32 %v374, %v546
        %v564 = vmul.f32 %v375, %v546
        %v565 = vmul.f32 %v376, %v546
        %v566 = vmul.f32 %v377, %v546
        %v567 = vmul.f32 %v378, %v546
        %v568 = vmul.f32 %v379, %v546
        %v569 = vmul.f32 %v380, %v546
        %v570 = vmul.f32 %v381, %v546
        %vm595 = vcmask 1043456
        %v596 = vrot.slane %v547, 4
        %v597 = vrot.slane %v548, 4
        %v598 = vsel %vm595, %v596, %v597
        %v599 = vrot.slane %v549, 4
        %v600 = vsel %vm595, %v597, %v599
        %v601 = vrot.slane %v550, 4
        %v602 = vrot.slane %v551, 4
        %v603 = vsel %vm595, %v601, %v602
        %v604 = vrot.slane %v552, 4
        %v605 = vsel %vm595, %v602, %v604
        %v606 = vrot.slane %v553, 4
        %v607 = vrot.slane %v554, 4
        %v608 = vsel %vm595, %v606, %v607
        %v609 = vrot.slane %v555, 4
        %v610 = vsel %vm595, %v607, %v609
        %v611 = vrot.slane %v556, 4
        %v612 = vrot.slane %v557, 4
        %v613 = vsel %vm595, %v611, %v612
        %v614 = vrot.slane %v558, 4
        %v615 = vsel %vm595, %v612, %v614
        %v616 = vrot.slane %v559, 4
        %v617 = vrot.slane %v560, 4
        %v618 = vsel %vm595, %v616, %v617
        %v619 = vrot.slane %v561, 4
        %v620 = vsel %vm595, %v617, %v619
        %v621 = vrot.slane %v562, 4
        %v622 = vrot.slane %v563, 4
        %v623 = vsel %vm595, %v621, %v622
        %v624 = vrot.slane %v564, 4
        %v625 = vsel %vm595, %v622, %v624
        %v626 = vrot.slane %v565, 4
        %v627 = vrot.slane %v566, 4
        %v628 = vsel %vm595, %v626, %v627
        %v629 = vrot.slane %v567, 4
        %v630 = vsel %vm595, %v627, %v629
        %v631 = vrot.slane %v568, 4
        %v632 = vrot.slane %v569, 4
        %v633 = vsel %vm595, %v631, %v632
        %v634 = vrot.slane %v570, 4
        %v635 = vsel %vm595, %v632, %v634
        %v652 = vadd.f32 %v527, %v598
        %v653 = vadd.f32 %v528, %v600
        %v654 = vadd.f32 %v529, %v603
        %v655 = vadd.f32 %v530, %v605
        %v656 = vadd.f32 %v531, %v608
        %v657 = vadd.f32 %v532, %v610
        %v658 = vadd.f32 %v533, %v613
        %v659 = vadd.f32 %v534, %v615
        %v660 = vadd.f32 %v535, %v618
        %v661 = vadd.f32 %v536, %v620
        %v662 = vadd.f32 %v537, %v623
        %v663 = vadd.f32 %v538, %v625
        %v664 = vadd.f32 %v539, %v628
        %v665 = vadd.f32 %v540, %v630
        %v666 = vadd.f32 %v541, %v633
        %v667 = vadd.f32 %v542, %v635
        %s668 = sadd.s32 %s355, 2
        %s669 = smul.u32 %s668, 24
        %s670 = scalar_lea.vmem [#allocation2], %s669
        %v671 = vld [vmem:[%s670] sm:$0xff]
        %v672 = vld [vmem:[%s670 + $0x8] sm:$0xff]
        %v673 = vld [vmem:[%s670 + $0x10] sm:$0xf]
        %v674 = vld [vmem:[%s670 + $0x18] sm:$0xff]
        %v675 = vld [vmem:[%s670 + $0x20] sm:$0xff]
        %v676 = vld [vmem:[%s670 + $0x28] sm:$0xf]
        %v677 = vld [vmem:[%s670 + $0x30] sm:$0xff]
        %v678 = vld [vmem:[%s670 + $0x38] sm:$0xff]
        %v679 = vld [vmem:[%s670 + $0x40] sm:$0xf]
        %v680 = vld [vmem:[%s670 + $0x48] sm:$0xff]
        %v681 = vld [vmem:[%s670 + $0x50] sm:$0xff]
        %v682 = vld [vmem:[%s670 + $0x58] sm:$0xf]
        %v683 = vld [vmem:[%s670 + $0x60] sm:$0xff]
        %v684 = vld [vmem:[%s670 + $0x68] sm:$0xff]
        %v685 = vld [vmem:[%s670 + $0x70] sm:$0xf]
        %v686 = vld [vmem:[%s670 + $0x78] sm:$0xff]
        %v687 = vld [vmem:[%s670 + $0x80] sm:$0xff]
        %v688 = vld [vmem:[%s670 + $0x88] sm:$0xf]
        %v689 = vld [vmem:[%s670 + $0x90] sm:$0xff]
        %v690 = vld [vmem:[%s670 + $0x98] sm:$0xff]
        %v691 = vld [vmem:[%s670 + $0xa0] sm:$0xf]
        %v692 = vld [vmem:[%s670 + $0xa8] sm:$0xff]
        %v693 = vld [vmem:[%s670 + $0xb0] sm:$0xff]
        %v694 = vld [vmem:[%s670 + $0xb8] sm:$0xf]
        %v695 = vlaneseq
        %v696 = vshrl.u32 %v695, 7
        %v697 = vsub.s32 3, %v696
        %v698 = vrot.slane %v351, %v697
        %v699 = vmul.f32 %v671, %v698
        %v700 = vmul.f32 %v672, %v698
        %v701 = vmul.f32 %v674, %v698
        %v702 = vmul.f32 %v675, %v698
        %v703 = vmul.f32 %v677, %v698
        %v704 = vmul.f32 %v678, %v698
        %v705 = vmul.f32 %v680, %v698
        %v706 = vmul.f32 %v681, %v698
        %v707 = vmul.f32 %v683, %v698
        %v708 = vmul.f32 %v684, %v698
        %v709 = vmul.f32 %v686, %v698
        %v710 = vmul.f32 %v687, %v698
        %v711 = vmul.f32 %v689, %v698
        %v712 = vmul.f32 %v690, %v698
        %v713 = vmul.f32 %v692, %v698
        %v714 = vmul.f32 %v693, %v698
        %v715 = vadd.f32 %v652, %v699
        %v716 = vadd.f32 %v653, %v700
        %v717 = vadd.f32 %v654, %v701
        %v718 = vadd.f32 %v655, %v702
        %v719 = vadd.f32 %v656, %v703
        %v720 = vadd.f32 %v657, %v704
        %v721 = vadd.f32 %v658, %v705
        %v722 = vadd.f32 %v659, %v706
        %v723 = vadd.f32 %v660, %v707
        %v724 = vadd.f32 %v661, %v708
        %v725 = vadd.f32 %v662, %v709
        %v726 = vadd.f32 %v663, %v710
        %v727 = vadd.f32 %v664, %v711
        %v728 = vadd.f32 %v665, %v712
        %v729 = vadd.f32 %v666, %v713
        %v730 = vadd.f32 %v667, %v714
        %v731 = vlaneseq
        %v732 = vshrl.u32 %v731, 7
        %v733 = vsub.s32 4, %v732
        %v734 = vrot.slane %v351, %v733
        %v735 = vmul.f32 %v671, %v734
        %v736 = vmul.f32 %v672, %v734
        %v737 = vmul.f32 %v673, %v734
        %v738 = vmul.f32 %v674, %v734
        %v739 = vmul.f32 %v675, %v734
        %v740 = vmul.f32 %v676, %v734
        %v741 = vmul.f32 %v677, %v734
        %v742 = vmul.f32 %v678, %v734
        %v743 = vmul.f32 %v679, %v734
        %v744 = vmul.f32 %v680, %v734
        %v745 = vmul.f32 %v681, %v734
        %v746 = vmul.f32 %v682, %v734
        %v747 = vmul.f32 %v683, %v734
        %v748 = vmul.f32 %v684, %v734
        %v749 = vmul.f32 %v685, %v734
        %v750 = vmul.f32 %v686, %v734
        %v751 = vmul.f32 %v687, %v734
        %v752 = vmul.f32 %v688, %v734
        %v753 = vmul.f32 %v689, %v734
        %v754 = vmul.f32 %v690, %v734
        %v755 = vmul.f32 %v691, %v734
        %v756 = vmul.f32 %v692, %v734
        %v757 = vmul.f32 %v693, %v734
        %v758 = vmul.f32 %v694, %v734
        %v783 = vrot.slane %v735, 2
        %v784 = vrot.slane %v736, 2
        %v785 = vsel %vm470, %v783, %v784
        %v786 = vrot.slane %v737, 2
        %v787 = vsel %vm470, %v784, %v786
        %v788 = vrot.slane %v738, 2
        %v789 = vrot.slane %v739, 2
        %v790 = vsel %vm470, %v788, %v789
        %v791 = vrot.slane %v740, 2
        %v792 = vsel %vm470, %v789, %v791
        %v793 = vrot.slane %v741, 2
        %v794 = vrot.slane %v742, 2
        %v795 = vsel %vm470, %v793, %v794
        %v796 = vrot.slane %v743, 2
        %v797 = vsel %vm470, %v794, %v796
        %v798 = vrot.slane %v744, 2
        %v799 = vrot.slane %v745, 2
        %v800 = vsel %vm470, %v798, %v799
        %v801 = vrot.slane %v746, 2
        %v802 = vsel %vm470, %v799, %v801
        %v803 = vrot.slane %v747, 2
        %v804 = vrot.slane %v748, 2
        %v805 = vsel %vm470, %v803, %v804
        %v806 = vrot.slane %v749, 2
        %v807 = vsel %vm470, %v804, %v806
        %v808 = vrot.slane %v750, 2
        %v809 = vrot.slane %v751, 2
        %v810 = vsel %vm470, %v808, %v809
        %v811 = vrot.slane %v752, 2
        %v812 = vsel %vm470, %v809, %v811
        %v813 = vrot.slane %v753, 2
        %v814 = vrot.slane %v754, 2
        %v815 = vsel %vm470, %v813, %v814
        %v816 = vrot.slane %v755, 2
        %v817 = vsel %vm470, %v814, %v816
        %v818 = vrot.slane %v756, 2
        %v819 = vrot.slane %v757, 2
        %v820 = vsel %vm470, %v818, %v819
        %v821 = vrot.slane %v758, 2
        %v822 = vsel %vm470, %v819, %v821
        %v839 = vadd.f32 %v715, %v785
        %v840 = vadd.f32 %v716, %v787
        %v841 = vadd.f32 %v717, %v790
        %v842 = vadd.f32 %v718, %v792
        %v843 = vadd.f32 %v719, %v795
        %v844 = vadd.f32 %v720, %v797
        %v845 = vadd.f32 %v721, %v800
        %v846 = vadd.f32 %v722, %v802
        %v847 = vadd.f32 %v723, %v805
        %v848 = vadd.f32 %v724, %v807
        %v849 = vadd.f32 %v725, %v810
        %v850 = vadd.f32 %v726, %v812
        %v851 = vadd.f32 %v727, %v815
        %v852 = vadd.f32 %v728, %v817
        %v853 = vadd.f32 %v729, %v820
        %v854 = vadd.f32 %v730, %v822
        %v855 = vlaneseq
        %v856 = vshrl.u32 %v855, 7
        %v857 = vsub.s32 5, %v856
        %v858 = vrot.slane %v351, %v857
        %v859 = vmul.f32 %v671, %v858
        %v860 = vmul.f32 %v672, %v858
        %v861 = vmul.f32 %v673, %v858
        %v862 = vmul.f32 %v674, %v858
        %v863 = vmul.f32 %v675, %v858
        %v864 = vmul.f32 %v676, %v858
        %v865 = vmul.f32 %v677, %v858
        %v866 = vmul.f32 %v678, %v858
        %v867 = vmul.f32 %v679, %v858
        %v868 = vmul.f32 %v680, %v858
        %v869 = vmul.f32 %v681, %v858
        %v870 = vmul.f32 %v682, %v858
        %v871 = vmul.f32 %v683, %v858
        %v872 = vmul.f32 %v684, %v858
        %v873 = vmul.f32 %v685, %v858
        %v874 = vmul.f32 %v686, %v858
        %v875 = vmul.f32 %v687, %v858
        %v876 = vmul.f32 %v688, %v858
        %v877 = vmul.f32 %v689, %v858
        %v878 = vmul.f32 %v690, %v858
        %v879 = vmul.f32 %v691, %v858
        %v880 = vmul.f32 %v692, %v858
        %v881 = vmul.f32 %v693, %v858
        %v882 = vmul.f32 %v694, %v858
        %v907 = vrot.slane %v859, 4
        %v908 = vrot.slane %v860, 4
        %v909 = vsel %vm595, %v907, %v908
        %v910 = vrot.slane %v861, 4
        %v911 = vsel %vm595, %v908, %v910
        %v912 = vrot.slane %v862, 4
        %v913 = vrot.slane %v863, 4
        %v914 = vsel %vm595, %v912, %v913
        %v915 = vrot.slane %v864, 4
        %v916 = vsel %vm595, %v913, %v915
        %v917 = vrot.slane %v865, 4
        %v918 = vrot.slane %v866, 4
        %v919 = vsel %vm595, %v917, %v918
        %v920 = vrot.slane %v867, 4
        %v921 = vsel %vm595, %v918, %v920
        %v922 = vrot.slane %v868, 4
        %v923 = vrot.slane %v869, 4
        %v924 = vsel %vm595, %v922, %v923
        %v925 = vrot.slane %v870, 4
        %v926 = vsel %vm595, %v923, %v925
        %v927 = vrot.slane %v871, 4
        %v928 = vrot.slane %v872, 4
        %v929 = vsel %vm595, %v927, %v928
        %v930 = vrot.slane %v873, 4
        %v931 = vsel %vm595, %v928, %v930
        %v932 = vrot.slane %v874, 4
        %v933 = vrot.slane %v875, 4
        %v934 = vsel %vm595, %v932, %v933
        %v935 = vrot.slane %v876, 4
        %v936 = vsel %vm595, %v933, %v935
        %v937 = vrot.slane %v877, 4
        %v938 = vrot.slane %v878, 4
        %v939 = vsel %vm595, %v937, %v938
        %v940 = vrot.slane %v879, 4
        %v941 = vsel %vm595, %v938, %v940
        %v942 = vrot.slane %v880, 4
        %v943 = vrot.slane %v881, 4
        %v944 = vsel %vm595, %v942, %v943
        %v945 = vrot.slane %v882, 4
        %v946 = vsel %vm595, %v943, %v945
        %v963 = vadd.f32 %v839, %v909
        %v964 = vadd.f32 %v840, %v911
        %v965 = vadd.f32 %v841, %v914
        %v966 = vadd.f32 %v842, %v916
        %v967 = vadd.f32 %v843, %v919
        %v968 = vadd.f32 %v844, %v921
        %v969 = vadd.f32 %v845, %v924
        %v970 = vadd.f32 %v846, %v926
        %v971 = vadd.f32 %v847, %v929
        %v972 = vadd.f32 %v848, %v931
        %v973 = vadd.f32 %v849, %v934
        %v974 = vadd.f32 %v850, %v936
        %v975 = vadd.f32 %v851, %v939
        %v976 = vadd.f32 %v852, %v941
        %v977 = vadd.f32 %v853, %v944
        %v978 = vadd.f32 %v854, %v946
        %s979 = sadd.s32 %s355, 4
        %s980 = smul.u32 %s979, 24
        %s981 = scalar_lea.vmem [#allocation2], %s980
        %v982 = vld [vmem:[%s981] sm:$0xff]
        %v983 = vld [vmem:[%s981 + $0x8] sm:$0xff]
        %v984 = vld [vmem:[%s981 + $0x10] sm:$0xf]
        %v985 = vld [vmem:[%s981 + $0x18] sm:$0xff]
        %v986 = vld [vmem:[%s981 + $0x20] sm:$0xff]
        %v987 = vld [vmem:[%s981 + $0x28] sm:$0xf]
        %v988 = vld [vmem:[%s981 + $0x30] sm:$0xff]
        %v989 = vld [vmem:[%s981 + $0x38] sm:$0xff]
        %v990 = vld [vmem:[%s981 + $0x40] sm:$0xf]
        %v991 = vld [vmem:[%s981 + $0x48] sm:$0xff]
        %v992 = vld [vmem:[%s981 + $0x50] sm:$0xff]
        %v993 = vld [vmem:[%s981 + $0x58] sm:$0xf]
        %v994 = vld [vmem:[%s981 + $0x60] sm:$0xff]
        %v995 = vld [vmem:[%s981 + $0x68] sm:$0xff]
        %v996 = vld [vmem:[%s981 + $0x70] sm:$0xf]
        %v997 = vld [vmem:[%s981 + $0x78] sm:$0xff]
        %v998 = vld [vmem:[%s981 + $0x80] sm:$0xff]
        %v999 = vld [vmem:[%s981 + $0x88] sm:$0xf]
        %v1000 = vld [vmem:[%s981 + $0x90] sm:$0xff]
        %v1001 = vld [vmem:[%s981 + $0x98] sm:$0xff]
        %v1002 = vld [vmem:[%s981 + $0xa0] sm:$0xf]
        %v1003 = vld [vmem:[%s981 + $0xa8] sm:$0xff]
        %v1004 = vld [vmem:[%s981 + $0xb0] sm:$0xff]
        %v1005 = vld [vmem:[%s981 + $0xb8] sm:$0xf]
        %v1006 = vlaneseq
        %v1007 = vshrl.u32 %v1006, 7
        %v1008 = vsub.s32 6, %v1007
        %v1009 = vrot.slane %v351, %v1008
        %v1010 = vmul.f32 %v982, %v1009
        %v1011 = vmul.f32 %v983, %v1009
        %v1012 = vmul.f32 %v985, %v1009
        %v1013 = vmul.f32 %v986, %v1009
        %v1014 = vmul.f32 %v988, %v1009
        %v1015 = vmul.f32 %v989, %v1009
        %v1016 = vmul.f32 %v991, %v1009
        %v1017 = vmul.f32 %v992, %v1009
        %v1018 = vmul.f32 %v994, %v1009
        %v1019 = vmul.f32 %v995, %v1009
        %v1020 = vmul.f32 %v997, %v1009
        %v1021 = vmul.f32 %v998, %v1009
        %v1022 = vmul.f32 %v1000, %v1009
        %v1023 = vmul.f32 %v1001, %v1009
        %v1024 = vmul.f32 %v1003, %v1009
        %v1025 = vmul.f32 %v1004, %v1009
        %v1026 = vadd.f32 %v963, %v1010
        %v1027 = vadd.f32 %v964, %v1011
        %v1028 = vadd.f32 %v965, %v1012
        %v1029 = vadd.f32 %v966, %v1013
        %v1030 = vadd.f32 %v967, %v1014
        %v1031 = vadd.f32 %v968, %v1015
        %v1032 = vadd.f32 %v969, %v1016
        %v1033 = vadd.f32 %v970, %v1017
        %v1034 = vadd.f32 %v971, %v1018
        %v1035 = vadd.f32 %v972, %v1019
        %v1036 = vadd.f32 %v973, %v1020
        %v1037 = vadd.f32 %v974, %v1021
        %v1038 = vadd.f32 %v975, %v1022
        %v1039 = vadd.f32 %v976, %v1023
        %v1040 = vadd.f32 %v977, %v1024
        %v1041 = vadd.f32 %v978, %v1025
        %v1042 = vlaneseq
        %v1043 = vshrl.u32 %v1042, 7
        %v1044 = vsub.s32 7, %v1043
        %v1045 = vrot.slane %v351, %v1044
        %v1046 = vmul.f32 %v982, %v1045
        %v1047 = vmul.f32 %v983, %v1045
        %v1048 = vmul.f32 %v984, %v1045
        %v1049 = vmul.f32 %v985, %v1045
        %v1050 = vmul.f32 %v986, %v1045
        %v1051 = vmul.f32 %v987, %v1045
        %v1052 = vmul.f32 %v988, %v1045
        %v1053 = vmul.f32 %v989, %v1045
        %v1054 = vmul.f32 %v990, %v1045
        %v1055 = vmul.f32 %v991, %v1045
        %v1056 = vmul.f32 %v992, %v1045
        %v1057 = vmul.f32 %v993, %v1045
        %v1058 = vmul.f32 %v994, %v1045
        %v1059 = vmul.f32 %v995, %v1045
        %v1060 = vmul.f32 %v996, %v1045
        %v1061 = vmul.f32 %v997, %v1045
        %v1062 = vmul.f32 %v998, %v1045
        %v1063 = vmul.f32 %v999, %v1045
        %v1064 = vmul.f32 %v1000, %v1045
        %v1065 = vmul.f32 %v1001, %v1045
        %v1066 = vmul.f32 %v1002, %v1045
        %v1067 = vmul.f32 %v1003, %v1045
        %v1068 = vmul.f32 %v1004, %v1045
        %v1069 = vmul.f32 %v1005, %v1045
        %v1094 = vrot.slane %v1046, 2
        %v1095 = vrot.slane %v1047, 2
        %v1096 = vsel %vm470, %v1094, %v1095
        %v1097 = vrot.slane %v1048, 2
        %v1098 = vsel %vm470, %v1095, %v1097
        %v1099 = vrot.slane %v1049, 2
        %v1100 = vrot.slane %v1050, 2
        %v1101 = vsel %vm470, %v1099, %v1100
        %v1102 = vrot.slane %v1051, 2
        %v1103 = vsel %vm470, %v1100, %v1102
        %v1104 = vrot.slane %v1052, 2
        %v1105 = vrot.slane %v1053, 2
        %v1106 = vsel %vm470, %v1104, %v1105
        %v1107 = vrot.slane %v1054, 2
        %v1108 = vsel %vm470, %v1105, %v1107
        %v1109 = vrot.slane %v1055, 2
        %v1110 = vrot.slane %v1056, 2
        %v1111 = vsel %vm470, %v1109, %v1110
        %v1112 = vrot.slane %v1057, 2
        %v1113 = vsel %vm470, %v1110, %v1112
        %v1114 = vrot.slane %v1058, 2
        %v1115 = vrot.slane %v1059, 2
        %v1116 = vsel %vm470, %v1114, %v1115
        %v1117 = vrot.slane %v1060, 2
        %v1118 = vsel %vm470, %v1115, %v1117
        %v1119 = vrot.slane %v1061, 2
        %v1120 = vrot.slane %v1062, 2
        %v1121 = vsel %vm470, %v1119, %v1120
        %v1122 = vrot.slane %v1063, 2
        %v1123 = vsel %vm470, %v1120, %v1122
        %v1124 = vrot.slane %v1064, 2
        %v1125 = vrot.slane %v1065, 2
        %v1126 = vsel %vm470, %v1124, %v1125
        %v1127 = vrot.slane %v1066, 2
        %v1128 = vsel %vm470, %v1125, %v1127
        %v1129 = vrot.slane %v1067, 2
        %v1130 = vrot.slane %v1068, 2
        %v1131 = vsel %vm470, %v1129, %v1130
        %v1132 = vrot.slane %v1069, 2
        %v1133 = vsel %vm470, %v1130, %v1132
        %v1150 = vadd.f32 %v1026, %v1096
        %v1151 = vadd.f32 %v1027, %v1098
        %v1152 = vadd.f32 %v1028, %v1101
        %v1153 = vadd.f32 %v1029, %v1103
        %v1154 = vadd.f32 %v1030, %v1106
        %v1155 = vadd.f32 %v1031, %v1108
        %v1156 = vadd.f32 %v1032, %v1111
        %v1157 = vadd.f32 %v1033, %v1113
        %v1158 = vadd.f32 %v1034, %v1116
        %v1159 = vadd.f32 %v1035, %v1118
        %v1160 = vadd.f32 %v1036, %v1121
        %v1161 = vadd.f32 %v1037, %v1123
        %v1162 = vadd.f32 %v1038, %v1126
        %v1163 = vadd.f32 %v1039, %v1128
        %v1164 = vadd.f32 %v1040, %v1131
        %v1165 = vadd.f32 %v1041, %v1133
        %v1166 = vlaneseq
        %v1167 = vshrl.u32 %v1166, 7
        %v1168 = vsub.s32 0, %v1167
        %v1169 = vrot.slane %v352, %v1168
        %v1170 = vmul.f32 %v982, %v1169
        %v1171 = vmul.f32 %v983, %v1169
        %v1172 = vmul.f32 %v984, %v1169
        %v1173 = vmul.f32 %v985, %v1169
        %v1174 = vmul.f32 %v986, %v1169
        %v1175 = vmul.f32 %v987, %v1169
        %v1176 = vmul.f32 %v988, %v1169
        %v1177 = vmul.f32 %v989, %v1169
        %v1178 = vmul.f32 %v990, %v1169
        %v1179 = vmul.f32 %v991, %v1169
        %v1180 = vmul.f32 %v992, %v1169
        %v1181 = vmul.f32 %v993, %v1169
        %v1182 = vmul.f32 %v994, %v1169
        %v1183 = vmul.f32 %v995, %v1169
        %v1184 = vmul.f32 %v996, %v1169
        %v1185 = vmul.f32 %v997, %v1169
        %v1186 = vmul.f32 %v998, %v1169
        %v1187 = vmul.f32 %v999, %v1169
        %v1188 = vmul.f32 %v1000, %v1169
        %v1189 = vmul.f32 %v1001, %v1169
        %v1190 = vmul.f32 %v1002, %v1169
        %v1191 = vmul.f32 %v1003, %v1169
        %v1192 = vmul.f32 %v1004, %v1169
        %v1193 = vmul.f32 %v1005, %v1169
        %v1218 = vrot.slane %v1170, 4
        %v1219 = vrot.slane %v1171, 4
        %v1220 = vsel %vm595, %v1218, %v1219
        %v1221 = vrot.slane %v1172, 4
        %v1222 = vsel %vm595, %v1219, %v1221
        %v1223 = vrot.slane %v1173, 4
        %v1224 = vrot.slane %v1174, 4
        %v1225 = vsel %vm595, %v1223, %v1224
        %v1226 = vrot.slane %v1175, 4
        %v1227 = vsel %vm595, %v1224, %v1226
        %v1228 = vrot.slane %v1176, 4
        %v1229 = vrot.slane %v1177, 4
        %v1230 = vsel %vm595, %v1228, %v1229
        %v1231 = vrot.slane %v1178, 4
        %v1232 = vsel %vm595, %v1229, %v1231
        %v1233 = vrot.slane %v1179, 4
        %v1234 = vrot.slane %v1180, 4
        %v1235 = vsel %vm595, %v1233, %v1234
        %v1236 = vrot.slane %v1181, 4
        %v1237 = vsel %vm595, %v1234, %v1236
        %v1238 = vrot.slane %v1182, 4
        %v1239 = vrot.slane %v1183, 4
        %v1240 = vsel %vm595, %v1238, %v1239
        %v1241 = vrot.slane %v1184, 4
        %v1242 = vsel %vm595, %v1239, %v1241
        %v1243 = vrot.slane %v1185, 4
        %v1244 = vrot.slane %v1186, 4
        %v1245 = vsel %vm595, %v1243, %v1244
        %v1246 = vrot.slane %v1187, 4
        %v1247 = vsel %vm595, %v1244, %v1246
        %v1248 = vrot.slane %v1188, 4
        %v1249 = vrot.slane %v1189, 4
        %v1250 = vsel %vm595, %v1248, %v1249
        %v1251 = vrot.slane %v1190, 4
        %v1252 = vsel %vm595, %v1249, %v1251
        %v1253 = vrot.slane %v1191, 4
        %v1254 = vrot.slane %v1192, 4
        %v1255 = vsel %vm595, %v1253, %v1254
        %v1256 = vrot.slane %v1193, 4
        %v1257 = vsel %vm595, %v1254, %v1256
        %v1274 = vadd.f32 %v1150, %v1220
        %v1275 = vadd.f32 %v1151, %v1222
        %v1276 = vadd.f32 %v1152, %v1225
        %v1277 = vadd.f32 %v1153, %v1227
        %v1278 = vadd.f32 %v1154, %v1230
        %v1279 = vadd.f32 %v1155, %v1232
        %v1280 = vadd.f32 %v1156, %v1235
        %v1281 = vadd.f32 %v1157, %v1237
        %v1282 = vadd.f32 %v1158, %v1240
        %v1283 = vadd.f32 %v1159, %v1242
        %v1284 = vadd.f32 %v1160, %v1245
        %v1285 = vadd.f32 %v1161, %v1247
        %v1286 = vadd.f32 %v1162, %v1250
        %v1287 = vadd.f32 %v1163, %v1252
        %v1288 = vadd.f32 %v1164, %v1255
        %v1289 = vadd.f32 %v1165, %v1257
        %v1290 = vpack.c.bf16 %v1275, %v1274
        %v1291 = vpack.c.bf16 %v1277, %v1276
        %v1292 = vpack.c.bf16 %v1279, %v1278
        %v1293 = vpack.c.bf16 %v1281, %v1280
        %v1294 = vpack.c.bf16 %v1283, %v1282
        %v1295 = vpack.c.bf16 %v1285, %v1284
        %v1296 = vpack.c.bf16 %v1287, %v1286
        %v1297 = vpack.c.bf16 %v1289, %v1288
        %v1300 = vunpack.c.l.b16 %v353
        %v1301 = vunpack.c.l.b16 %v354
        %v1302 = vpack.c.b16 %v1301, %v1300
        %vm1304 = vcmask 130048
        %v1306 = vsel %vm1304, %v1290, 0
        %v1309 = vsel %vm1304, %v1291, 0
        %v1312 = vsel %vm1304, %v1292, 0
        %v1315 = vsel %vm1304, %v1293, 0
        %v1318 = vsel %vm1304, %v1294, 0
        %v1321 = vsel %vm1304, %v1295, 0
        %v1324 = vsel %vm1304, %v1296, 0
        %v1327 = vsel %vm1304, %v1297, 0
        %1329 = vmatprep.subr.bf16.mxu0 0
        %1330 = vmatpush1.bf16.msra.mxu0 0
        %1331 = vmatprep.subr.bf16.mxu0 0
        %1332 = vmatpush1.bf16.msra.mxu0 0
        %1333 = vmatprep.subr.bf16.mxu0 0
        %1334 = vmatpush1.bf16.msra.mxu0 0
        %1335 = vmatprep.subr.bf16.mxu0 0
        %1336 = vmatpush1.bf16.msra.mxu0 0
        %1337 = vmatprep.subr.bf16.mxu0 0
        %1338 = vmatpush1.bf16.msra.mxu0 0
        %1339 = vmatprep.subr.bf16.mxu0 0
        %1340 = vmatpush1.bf16.msra.mxu0 0
        %1341 = vmatprep.subr.bf16.mxu0 0
        %1342 = vmatpush1.bf16.msra.mxu0 0
        %1343 = vmatprep.subr.bf16.mxu0 0
        %1344 = vmatpush1.bf16.msra.mxu0 %v1302
        %1345 = vmatprep.subr.bf16.mxu0 0
        %1346 = vmatpush2.bf16.msra.mxu0 0
        %1347 = vmatprep.subr.bf16.mxu0 0
        %1348 = vmatpush2.bf16.msra.mxu0 0
        %1349 = vmatprep.subr.bf16.mxu0 0
        %1350 = vmatpush2.bf16.msra.mxu0 0
        %1351 = vmatprep.subr.bf16.mxu0 0
        %1352 = vmatpush2.bf16.msra.mxu0 0
        %1353 = vmatprep.subr.bf16.mxu0 0
        %1354 = vmatpush2.bf16.msra.mxu0 0
        %1355 = vmatprep.subr.bf16.mxu0 0
        %1356 = vmatpush2.bf16.msra.mxu0 0
        %1357 = vmatprep.subr.bf16.mxu0 0
        %1358 = vmatpush2.bf16.msra.mxu0 0
        %1359 = vmatprep.subr.bf16.mxu0 0
        %1360 = vmatpush2.bf16.msra.mxu0 0
        %1361 = vmatprep.mubr.bf16.mxu0 0
        %1362 = vmatmul.mubr.bf16.gmra.mxu0 %v1306
        %v1363 = vpop.f32.mrf.mxu0
        %v1364 = vadd.f32 0.0, %v1363
        %v1365 = vpop.f32.mrf.mxu0
        %v1366 = vpop.f32.mrf.mxu0
        %v1367 = vadd.f32 0.0, %v1366
        %v1368 = vpop.f32.mrf.mxu0
        %1369 = vmatprep.mubr.bf16.mxu0 0
        %1370 = vmatmul.mubr.bf16.gmra.mxu0 %v1309
        %v1371 = vpop.f32.mrf.mxu0
        %v1372 = vadd.f32 0.0, %v1371
        %v1373 = vpop.f32.mrf.mxu0
        %v1374 = vpop.f32.mrf.mxu0
        %v1375 = vadd.f32 0.0, %v1374
        %v1376 = vpop.f32.mrf.mxu0
        %1377 = vmatprep.mubr.bf16.mxu0 0
        %1378 = vmatmul.mubr.bf16.gmra.mxu0 %v1312
        %v1379 = vpop.f32.mrf.mxu0
        %v1380 = vadd.f32 0.0, %v1379
        %v1381 = vpop.f32.mrf.mxu0
        %v1382 = vpop.f32.mrf.mxu0
        %v1383 = vadd.f32 0.0, %v1382
        %v1384 = vpop.f32.mrf.mxu0
        %1385 = vmatprep.mubr.bf16.mxu0 0
        %1386 = vmatmul.mubr.bf16.gmra.mxu0 %v1315
        %v1387 = vpop.f32.mrf.mxu0
        %v1388 = vadd.f32 0.0, %v1387
        %v1389 = vpop.f32.mrf.mxu0
        %v1390 = vpop.f32.mrf.mxu0
        %v1391 = vadd.f32 0.0, %v1390
        %v1392 = vpop.f32.mrf.mxu0
        %1393 = vmatprep.mubr.bf16.mxu0 0
        %1394 = vmatmul.mubr.bf16.gmra.mxu0 %v1318
        %v1395 = vpop.f32.mrf.mxu0
        %v1396 = vadd.f32 0.0, %v1395
        %v1397 = vpop.f32.mrf.mxu0
        %v1398 = vpop.f32.mrf.mxu0
        %v1399 = vadd.f32 0.0, %v1398
        %v1400 = vpop.f32.mrf.mxu0
        %1401 = vmatprep.mubr.bf16.mxu0 0
        %1402 = vmatmul.mubr.bf16.gmra.mxu0 %v1321
        %v1403 = vpop.f32.mrf.mxu0
        %v1404 = vadd.f32 0.0, %v1403
        %v1405 = vpop.f32.mrf.mxu0
        %v1406 = vpop.f32.mrf.mxu0
        %v1407 = vadd.f32 0.0, %v1406
        %v1408 = vpop.f32.mrf.mxu0
        %1409 = vmatprep.mubr.bf16.mxu0 0
        %1410 = vmatmul.mubr.bf16.gmra.mxu0 %v1324
        %v1411 = vpop.f32.mrf.mxu0
        %v1412 = vadd.f32 0.0, %v1411
        %v1413 = vpop.f32.mrf.mxu0
        %v1414 = vpop.f32.mrf.mxu0
        %v1415 = vadd.f32 0.0, %v1414
        %v1416 = vpop.f32.mrf.mxu0
        %1417 = vmatprep.mubr.bf16.mxu0 0
        %1418 = vmatmul.mubr.bf16.gmra.mxu0 %v1327
        %v1419 = vpop.f32.mrf.mxu0
        %v1420 = vadd.f32 0.0, %v1419
        %v1421 = vpop.f32.mrf.mxu0
        %v1422 = vpop.f32.mrf.mxu0
        %v1423 = vadd.f32 0.0, %v1422
        %v1424 = vpop.f32.mrf.mxu0
        %1425 = vdwg.mxu0
        %1426 = vst [vmem:[%s231] sm:$0xff] %v1364
        %1427 = vst [vmem:[%s231 + $0x8] sm:$0xff] %v1367
        %1428 = vst [vmem:[%s231 + $0x10] sm:$0xff] %v1372
        %1429 = vst [vmem:[%s231 + $0x18] sm:$0xff] %v1375
        %1430 = vst [vmem:[%s231 + $0x20] sm:$0xff] %v1380
        %1431 = vst [vmem:[%s231 + $0x28] sm:$0xff] %v1383
        %1432 = vst [vmem:[%s231 + $0x30] sm:$0xff] %v1388
        %1433 = vst [vmem:[%s231 + $0x38] sm:$0xff] %v1391
        %1434 = vst [vmem:[%s231 + $0x40] sm:$0xff] %v1396
        %1435 = vst [vmem:[%s231 + $0x48] sm:$0xff] %v1399
        %1436 = vst [vmem:[%s231 + $0x50] sm:$0xff] %v1404
        %1437 = vst [vmem:[%s231 + $0x58] sm:$0xff] %v1407
        %1438 = vst [vmem:[%s231 + $0x60] sm:$0xff] %v1412
        %1439 = vst [vmem:[%s231 + $0x68] sm:$0xff] %v1415
        %1440 = vst [vmem:[%s231 + $0x70] sm:$0xff] %v1420
        %1441 = vst [vmem:[%s231 + $0x78] sm:$0xff] %v1423
        %s1442 = sadd.s32 %s355, 8
        %s1443 = smul.u32 %s1442, 24
        %s1444 = scalar_lea.vmem [#allocation2], %s1443
        %v1445 = vld [vmem:[%s1444] sm:$0xff]
        %v1446 = vld [vmem:[%s1444 + $0x8] sm:$0xff]
        %v1447 = vld [vmem:[%s1444 + $0x10] sm:$0xf]
        %v1448 = vld [vmem:[%s1444 + $0x18] sm:$0xff]
        %v1449 = vld [vmem:[%s1444 + $0x20] sm:$0xff]
        %v1450 = vld [vmem:[%s1444 + $0x28] sm:$0xf]
        %v1451 = vld [vmem:[%s1444 + $0x30] sm:$0xff]
        %v1452 = vld [vmem:[%s1444 + $0x38] sm:$0xff]
        %v1453 = vld [vmem:[%s1444 + $0x40] sm:$0xf]
        %v1454 = vld [vmem:[%s1444 + $0x48] sm:$0xff]
        %v1455 = vld [vmem:[%s1444 + $0x50] sm:$0xff]
        %v1456 = vld [vmem:[%s1444 + $0x58] sm:$0xf]
        %v1457 = vld [vmem:[%s1444 + $0x60] sm:$0xff]
        %v1458 = vld [vmem:[%s1444 + $0x68] sm:$0xff]
        %v1459 = vld [vmem:[%s1444 + $0x70] sm:$0xf]
        %v1460 = vld [vmem:[%s1444 + $0x78] sm:$0xff]
        %v1461 = vld [vmem:[%s1444 + $0x80] sm:$0xff]
        %v1462 = vld [vmem:[%s1444 + $0x88] sm:$0xf]
        %v1463 = vld [vmem:[%s1444 + $0x90] sm:$0xff]
        %v1464 = vld [vmem:[%s1444 + $0x98] sm:$0xff]
        %v1465 = vld [vmem:[%s1444 + $0xa0] sm:$0xf]
        %v1466 = vld [vmem:[%s1444 + $0xa8] sm:$0xff]
        %v1467 = vld [vmem:[%s1444 + $0xb0] sm:$0xff]
        %v1468 = vld [vmem:[%s1444 + $0xb8] sm:$0xf]
        %v1469 = vmul.f32 %v1445, %v385
        %v1470 = vmul.f32 %v1446, %v385
        %v1471 = vmul.f32 %v1448, %v385
        %v1472 = vmul.f32 %v1449, %v385
        %v1473 = vmul.f32 %v1451, %v385
        %v1474 = vmul.f32 %v1452, %v385
        %v1475 = vmul.f32 %v1454, %v385
        %v1476 = vmul.f32 %v1455, %v385
        %v1477 = vmul.f32 %v1457, %v385
        %v1478 = vmul.f32 %v1458, %v385
        %v1479 = vmul.f32 %v1460, %v385
        %v1480 = vmul.f32 %v1461, %v385
        %v1481 = vmul.f32 %v1463, %v385
        %v1482 = vmul.f32 %v1464, %v385
        %v1483 = vmul.f32 %v1466, %v385
        %v1484 = vmul.f32 %v1467, %v385
        %v1485 = vadd.f32 %v1469, 0.0
        %v1486 = vadd.f32 %v1470, 0.0
        %v1487 = vadd.f32 %v1471, 0.0
        %v1488 = vadd.f32 %v1472, 0.0
        %v1489 = vadd.f32 %v1473, 0.0
        %v1490 = vadd.f32 %v1474, 0.0
        %v1491 = vadd.f32 %v1475, 0.0
        %v1492 = vadd.f32 %v1476, 0.0
        %v1493 = vadd.f32 %v1477, 0.0
        %v1494 = vadd.f32 %v1478, 0.0
        %v1495 = vadd.f32 %v1479, 0.0
        %v1496 = vadd.f32 %v1480, 0.0
        %v1497 = vadd.f32 %v1481, 0.0
        %v1498 = vadd.f32 %v1482, 0.0
        %v1499 = vadd.f32 %v1483, 0.0
        %v1500 = vadd.f32 %v1484, 0.0
        %v1501 = vmul.f32 %v1445, %v421
        %v1502 = vmul.f32 %v1446, %v421
        %v1503 = vmul.f32 %v1447, %v421
        %v1504 = vmul.f32 %v1448, %v421
        %v1505 = vmul.f32 %v1449, %v421
        %v1506 = vmul.f32 %v1450, %v421
        %v1507 = vmul.f32 %v1451, %v421
        %v1508 = vmul.f32 %v1452, %v421
        %v1509 = vmul.f32 %v1453, %v421
        %v1510 = vmul.f32 %v1454, %v421
        %v1511 = vmul.f32 %v1455, %v421
        %v1512 = vmul.f32 %v1456, %v421
        %v1513 = vmul.f32 %v1457, %v421
        %v1514 = vmul.f32 %v1458, %v421
        %v1515 = vmul.f32 %v1459, %v421
        %v1516 = vmul.f32 %v1460, %v421
        %v1517 = vmul.f32 %v1461, %v421
        %v1518 = vmul.f32 %v1462, %v421
        %v1519 = vmul.f32 %v1463, %v421
        %v1520 = vmul.f32 %v1464, %v421
        %v1521 = vmul.f32 %v1465, %v421
        %v1522 = vmul.f32 %v1466, %v421
        %v1523 = vmul.f32 %v1467, %v421
        %v1524 = vmul.f32 %v1468, %v421
        %v1549 = vrot.slane %v1501, 2
        %v1550 = vrot.slane %v1502, 2
        %v1551 = vsel %vm470, %v1549, %v1550
        %v1552 = vrot.slane %v1503, 2
        %v1553 = vsel %vm470, %v1550, %v1552
        %v1554 = vrot.slane %v1504, 2
        %v1555 = vrot.slane %v1505, 2
        %v1556 = vsel %vm470, %v1554, %v1555
        %v1557 = vrot.slane %v1506, 2
        %v1558 = vsel %vm470, %v1555, %v1557
        %v1559 = vrot.slane %v1507, 2
        %v1560 = vrot.slane %v1508, 2
        %v1561 = vsel %vm470, %v1559, %v1560
        %v1562 = vrot.slane %v1509, 2
        %v1563 = vsel %vm470, %v1560, %v1562
        %v1564 = vrot.slane %v1510, 2
        %v1565 = vrot.slane %v1511, 2
        %v1566 = vsel %vm470, %v1564, %v1565
        %v1567 = vrot.slane %v1512, 2
        %v1568 = vsel %vm470, %v1565, %v1567
        %v1569 = vrot.slane %v1513, 2
        %v1570 = vrot.slane %v1514, 2
        %v1571 = vsel %vm470, %v1569, %v1570
        %v1572 = vrot.slane %v1515, 2
        %v1573 = vsel %vm470, %v1570, %v1572
        %v1574 = vrot.slane %v1516, 2
        %v1575 = vrot.slane %v1517, 2
        %v1576 = vsel %vm470, %v1574, %v1575
        %v1577 = vrot.slane %v1518, 2
        %v1578 = vsel %vm470, %v1575, %v1577
        %v1579 = vrot.slane %v1519, 2
        %v1580 = vrot.slane %v1520, 2
        %v1581 = vsel %vm470, %v1579, %v1580
        %v1582 = vrot.slane %v1521, 2
        %v1583 = vsel %vm470, %v1580, %v1582
        %v1584 = vrot.slane %v1522, 2
        %v1585 = vrot.slane %v1523, 2
        %v1586 = vsel %vm470, %v1584, %v1585
        %v1587 = vrot.slane %v1524, 2
        %v1588 = vsel %vm470, %v1585, %v1587
        %v1605 = vadd.f32 %v1485, %v1551
        %v1606 = vadd.f32 %v1486, %v1553
        %v1607 = vadd.f32 %v1487, %v1556
        %v1608 = vadd.f32 %v1488, %v1558
        %v1609 = vadd.f32 %v1489, %v1561
        %v1610 = vadd.f32 %v1490, %v1563
        %v1611 = vadd.f32 %v1491, %v1566
        %v1612 = vadd.f32 %v1492, %v1568
        %v1613 = vadd.f32 %v1493, %v1571
        %v1614 = vadd.f32 %v1494, %v1573
        %v1615 = vadd.f32 %v1495, %v1576
        %v1616 = vadd.f32 %v1496, %v1578
        %v1617 = vadd.f32 %v1497, %v1581
        %v1618 = vadd.f32 %v1498, %v1583
        %v1619 = vadd.f32 %v1499, %v1586
        %v1620 = vadd.f32 %v1500, %v1588
        %v1621 = vmul.f32 %v1445, %v546
        %v1622 = vmul.f32 %v1446, %v546
        %v1623 = vmul.f32 %v1447, %v546
        %v1624 = vmul.f32 %v1448, %v546
        %v1625 = vmul.f32 %v1449, %v546
        %v1626 = vmul.f32 %v1450, %v546
        %v1627 = vmul.f32 %v1451, %v546
        %v1628 = vmul.f32 %v1452, %v546
        %v1629 = vmul.f32 %v1453, %v546
        %v1630 = vmul.f32 %v1454, %v546
        %v1631 = vmul.f32 %v1455, %v546
        %v1632 = vmul.f32 %v1456, %v546
        %v1633 = vmul.f32 %v1457, %v546
        %v1634 = vmul.f32 %v1458, %v546
        %v1635 = vmul.f32 %v1459, %v546
        %v1636 = vmul.f32 %v1460, %v546
        %v1637 = vmul.f32 %v1461, %v546
        %v1638 = vmul.f32 %v1462, %v546
        %v1639 = vmul.f32 %v1463, %v546
        %v1640 = vmul.f32 %v1464, %v546
        %v1641 = vmul.f32 %v1465, %v546
        %v1642 = vmul.f32 %v1466, %v546
        %v1643 = vmul.f32 %v1467, %v546
        %v1644 = vmul.f32 %v1468, %v546
        %v1669 = vrot.slane %v1621, 4
        %v1670 = vrot.slane %v1622, 4
        %v1671 = vsel %vm595, %v1669, %v1670
        %v1672 = vrot.slane %v1623, 4
        %v1673 = vsel %vm595, %v1670, %v1672
        %v1674 = vrot.slane %v1624, 4
        %v1675 = vrot.slane %v1625, 4
        %v1676 = vsel %vm595, %v1674, %v1675
        %v1677 = vrot.slane %v1626, 4
        %v1678 = vsel %vm595, %v1675, %v1677
        %v1679 = vrot.slane %v1627, 4
        %v1680 = vrot.slane %v1628, 4
        %v1681 = vsel %vm595, %v1679, %v1680
        %v1682 = vrot.slane %v1629, 4
        %v1683 = vsel %vm595, %v1680, %v1682
        %v1684 = vrot.slane %v1630, 4
        %v1685 = vrot.slane %v1631, 4
        %v1686 = vsel %vm595, %v1684, %v1685
        %v1687 = vrot.slane %v1632, 4
        %v1688 = vsel %vm595, %v1685, %v1687
        %v1689 = vrot.slane %v1633, 4
        %v1690 = vrot.slane %v1634, 4
        %v1691 = vsel %vm595, %v1689, %v1690
        %v1692 = vrot.slane %v1635, 4
        %v1693 = vsel %vm595, %v1690, %v1692
        %v1694 = vrot.slane %v1636, 4
        %v1695 = vrot.slane %v1637, 4
        %v1696 = vsel %vm595, %v1694, %v1695
        %v1697 = vrot.slane %v1638, 4
        %v1698 = vsel %vm595, %v1695, %v1697
        %v1699 = vrot.slane %v1639, 4
        %v1700 = vrot.slane %v1640, 4
        %v1701 = vsel %vm595, %v1699, %v1700
        %v1702 = vrot.slane %v1641, 4
        %v1703 = vsel %vm595, %v1700, %v1702
        %v1704 = vrot.slane %v1642, 4
        %v1705 = vrot.slane %v1643, 4
        %v1706 = vsel %vm595, %v1704, %v1705
        %v1707 = vrot.slane %v1644, 4
        %v1708 = vsel %vm595, %v1705, %v1707
        %v1725 = vadd.f32 %v1605, %v1671
        %v1726 = vadd.f32 %v1606, %v1673
        %v1727 = vadd.f32 %v1607, %v1676
        %v1728 = vadd.f32 %v1608, %v1678
        %v1729 = vadd.f32 %v1609, %v1681
        %v1730 = vadd.f32 %v1610, %v1683
        %v1731 = vadd.f32 %v1611, %v1686
        %v1732 = vadd.f32 %v1612, %v1688
        %v1733 = vadd.f32 %v1613, %v1691
        %v1734 = vadd.f32 %v1614, %v1693
        %v1735 = vadd.f32 %v1615, %v1696
        %v1736 = vadd.f32 %v1616, %v1698
        %v1737 = vadd.f32 %v1617, %v1701
        %v1738 = vadd.f32 %v1618, %v1703
        %v1739 = vadd.f32 %v1619, %v1706
        %v1740 = vadd.f32 %v1620, %v1708
        %s1741 = sadd.s32 %s355, 10
        %s1742 = smul.u32 %s1741, 24
        %s1743 = scalar_lea.vmem [#allocation2], %s1742
        %v1744 = vld [vmem:[%s1743] sm:$0xff]
        %v1745 = vld [vmem:[%s1743 + $0x8] sm:$0xff]
        %v1746 = vld [vmem:[%s1743 + $0x10] sm:$0xf]
        %v1747 = vld [vmem:[%s1743 + $0x18] sm:$0xff]
        %v1748 = vld [vmem:[%s1743 + $0x20] sm:$0xff]
        %v1749 = vld [vmem:[%s1743 + $0x28] sm:$0xf]
        %v1750 = vld [vmem:[%s1743 + $0x30] sm:$0xff]
        %v1751 = vld [vmem:[%s1743 + $0x38] sm:$0xff]
        %v1752 = vld [vmem:[%s1743 + $0x40] sm:$0xf]
        %v1753 = vld [vmem:[%s1743 + $0x48] sm:$0xff]
        %v1754 = vld [vmem:[%s1743 + $0x50] sm:$0xff]
        %v1755 = vld [vmem:[%s1743 + $0x58] sm:$0xf]
        %v1756 = vld [vmem:[%s1743 + $0x60] sm:$0xff]
        %v1757 = vld [vmem:[%s1743 + $0x68] sm:$0xff]
        %v1758 = vld [vmem:[%s1743 + $0x70] sm:$0xf]
        %v1759 = vld [vmem:[%s1743 + $0x78] sm:$0xff]
        %v1760 = vld [vmem:[%s1743 + $0x80] sm:$0xff]
        %v1761 = vld [vmem:[%s1743 + $0x88] sm:$0xf]
        %v1762 = vld [vmem:[%s1743 + $0x90] sm:$0xff]
        %v1763 = vld [vmem:[%s1743 + $0x98] sm:$0xff]
        %v1764 = vld [vmem:[%s1743 + $0xa0] sm:$0xf]
        %v1765 = vld [vmem:[%s1743 + $0xa8] sm:$0xff]
        %v1766 = vld [vmem:[%s1743 + $0xb0] sm:$0xff]
        %v1767 = vld [vmem:[%s1743 + $0xb8] sm:$0xf]
        %v1768 = vmul.f32 %v1744, %v698
        %v1769 = vmul.f32 %v1745, %v698
        %v1770 = vmul.f32 %v1747, %v698
        %v1771 = vmul.f32 %v1748, %v698
        %v1772 = vmul.f32 %v1750, %v698
        %v1773 = vmul.f32 %v1751, %v698
        %v1774 = vmul.f32 %v1753, %v698
        %v1775 = vmul.f32 %v1754, %v698
        %v1776 = vmul.f32 %v1756, %v698
        %v1777 = vmul.f32 %v1757, %v698
        %v1778 = vmul.f32 %v1759, %v698
        %v1779 = vmul.f32 %v1760, %v698
        %v1780 = vmul.f32 %v1762, %v698
        %v1781 = vmul.f32 %v1763, %v698
        %v1782 = vmul.f32 %v1765, %v698
        %v1783 = vmul.f32 %v1766, %v698
        %v1784 = vadd.f32 %v1725, %v1768
        %v1785 = vadd.f32 %v1726, %v1769
        %v1786 = vadd.f32 %v1727, %v1770
        %v1787 = vadd.f32 %v1728, %v1771
        %v1788 = vadd.f32 %v1729, %v1772
        %v1789 = vadd.f32 %v1730, %v1773
        %v1790 = vadd.f32 %v1731, %v1774
        %v1791 = vadd.f32 %v1732, %v1775
        %v1792 = vadd.f32 %v1733, %v1776
        %v1793 = vadd.f32 %v1734, %v1777
        %v1794 = vadd.f32 %v1735, %v1778
        %v1795 = vadd.f32 %v1736, %v1779
        %v1796 = vadd.f32 %v1737, %v1780
        %v1797 = vadd.f32 %v1738, %v1781
        %v1798 = vadd.f32 %v1739, %v1782
        %v1799 = vadd.f32 %v1740, %v1783
        %v1800 = vmul.f32 %v1744, %v734
        %v1801 = vmul.f32 %v1745, %v734
        %v1802 = vmul.f32 %v1746, %v734
        %v1803 = vmul.f32 %v1747, %v734
        %v1804 = vmul.f32 %v1748, %v734
        %v1805 = vmul.f32 %v1749, %v734
        %v1806 = vmul.f32 %v1750, %v734
        %v1807 = vmul.f32 %v1751, %v734
        %v1808 = vmul.f32 %v1752, %v734
        %v1809 = vmul.f32 %v1753, %v734
        %v1810 = vmul.f32 %v1754, %v734
        %v1811 = vmul.f32 %v1755, %v734
        %v1812 = vmul.f32 %v1756, %v734
        %v1813 = vmul.f32 %v1757, %v734
        %v1814 = vmul.f32 %v1758, %v734
        %v1815 = vmul.f32 %v1759, %v734
        %v1816 = vmul.f32 %v1760, %v734
        %v1817 = vmul.f32 %v1761, %v734
        %v1818 = vmul.f32 %v1762, %v734
        %v1819 = vmul.f32 %v1763, %v734
        %v1820 = vmul.f32 %v1764, %v734
        %v1821 = vmul.f32 %v1765, %v734
        %v1822 = vmul.f32 %v1766, %v734
        %v1823 = vmul.f32 %v1767, %v734
        %v1848 = vrot.slane %v1800, 2
        %v1849 = vrot.slane %v1801, 2
        %v1850 = vsel %vm470, %v1848, %v1849
        %v1851 = vrot.slane %v1802, 2
        %v1852 = vsel %vm470, %v1849, %v1851
        %v1853 = vrot.slane %v1803, 2
        %v1854 = vrot.slane %v1804, 2
        %v1855 = vsel %vm470, %v1853, %v1854
        %v1856 = vrot.slane %v1805, 2
        %v1857 = vsel %vm470, %v1854, %v1856
        %v1858 = vrot.slane %v1806, 2
        %v1859 = vrot.slane %v1807, 2
        %v1860 = vsel %vm470, %v1858, %v1859
        %v1861 = vrot.slane %v1808, 2
        %v1862 = vsel %vm470, %v1859, %v1861
        %v1863 = vrot.slane %v1809, 2
        %v1864 = vrot.slane %v1810, 2
        %v1865 = vsel %vm470, %v1863, %v1864
        %v1866 = vrot.slane %v1811, 2
        %v1867 = vsel %vm470, %v1864, %v1866
        %v1868 = vrot.slane %v1812, 2
        %v1869 = vrot.slane %v1813, 2
        %v1870 = vsel %vm470, %v1868, %v1869
        %v1871 = vrot.slane %v1814, 2
        %v1872 = vsel %vm470, %v1869, %v1871
        %v1873 = vrot.slane %v1815, 2
        %v1874 = vrot.slane %v1816, 2
        %v1875 = vsel %vm470, %v1873, %v1874
        %v1876 = vrot.slane %v1817, 2
        %v1877 = vsel %vm470, %v1874, %v1876
        %v1878 = vrot.slane %v1818, 2
        %v1879 = vrot.slane %v1819, 2
        %v1880 = vsel %vm470, %v1878, %v1879
        %v1881 = vrot.slane %v1820, 2
        %v1882 = vsel %vm470, %v1879, %v1881
        %v1883 = vrot.slane %v1821, 2
        %v1884 = vrot.slane %v1822, 2
        %v1885 = vsel %vm470, %v1883, %v1884
        %v1886 = vrot.slane %v1823, 2
        %v1887 = vsel %vm470, %v1884, %v1886
        %v1904 = vadd.f32 %v1784, %v1850
        %v1905 = vadd.f32 %v1785, %v1852
        %v1906 = vadd.f32 %v1786, %v1855
        %v1907 = vadd.f32 %v1787, %v1857
        %v1908 = vadd.f32 %v1788, %v1860
        %v1909 = vadd.f32 %v1789, %v1862
        %v1910 = vadd.f32 %v1790, %v1865
        %v1911 = vadd.f32 %v1791, %v1867
        %v1912 = vadd.f32 %v1792, %v1870
        %v1913 = vadd.f32 %v1793, %v1872
        %v1914 = vadd.f32 %v1794, %v1875
        %v1915 = vadd.f32 %v1795, %v1877
        %v1916 = vadd.f32 %v1796, %v1880
        %v1917 = vadd.f32 %v1797, %v1882
        %v1918 = vadd.f32 %v1798, %v1885
        %v1919 = vadd.f32 %v1799, %v1887
        %v1920 = vmul.f32 %v1744, %v858
        %v1921 = vmul.f32 %v1745, %v858
        %v1922 = vmul.f32 %v1746, %v858
        %v1923 = vmul.f32 %v1747, %v858
        %v1924 = vmul.f32 %v1748, %v858
        %v1925 = vmul.f32 %v1749, %v858
        %v1926 = vmul.f32 %v1750, %v858
        %v1927 = vmul.f32 %v1751, %v858
        %v1928 = vmul.f32 %v1752, %v858
        %v1929 = vmul.f32 %v1753, %v858
        %v1930 = vmul.f32 %v1754, %v858
        %v1931 = vmul.f32 %v1755, %v858
        %v1932 = vmul.f32 %v1756, %v858
        %v1933 = vmul.f32 %v1757, %v858
        %v1934 = vmul.f32 %v1758, %v858
        %v1935 = vmul.f32 %v1759, %v858
        %v1936 = vmul.f32 %v1760, %v858
        %v1937 = vmul.f32 %v1761, %v858
        %v1938 = vmul.f32 %v1762, %v858
        %v1939 = vmul.f32 %v1763, %v858
        %v1940 = vmul.f32 %v1764, %v858
        %v1941 = vmul.f32 %v1765, %v858
        %v1942 = vmul.f32 %v1766, %v858
        %v1943 = vmul.f32 %v1767, %v858
        %v1968 = vrot.slane %v1920, 4
        %v1969 = vrot.slane %v1921, 4
        %v1970 = vsel %vm595, %v1968, %v1969
        %v1971 = vrot.slane %v1922, 4
        %v1972 = vsel %vm595, %v1969, %v1971
        %v1973 = vrot.slane %v1923, 4
        %v1974 = vrot.slane %v1924, 4
        %v1975 = vsel %vm595, %v1973, %v1974
        %v1976 = vrot.slane %v1925, 4
        %v1977 = vsel %vm595, %v1974, %v1976
        %v1978 = vrot.slane %v1926, 4
        %v1979 = vrot.slane %v1927, 4
        %v1980 = vsel %vm595, %v1978, %v1979
        %v1981 = vrot.slane %v1928, 4
        %v1982 = vsel %vm595, %v1979, %v1981
        %v1983 = vrot.slane %v1929, 4
        %v1984 = vrot.slane %v1930, 4
        %v1985 = vsel %vm595, %v1983, %v1984
        %v1986 = vrot.slane %v1931, 4
        %v1987 = vsel %vm595, %v1984, %v1986
        %v1988 = vrot.slane %v1932, 4
        %v1989 = vrot.slane %v1933, 4
        %v1990 = vsel %vm595, %v1988, %v1989
        %v1991 = vrot.slane %v1934, 4
        %v1992 = vsel %vm595, %v1989, %v1991
        %v1993 = vrot.slane %v1935, 4
        %v1994 = vrot.slane %v1936, 4
        %v1995 = vsel %vm595, %v1993, %v1994
        %v1996 = vrot.slane %v1937, 4
        %v1997 = vsel %vm595, %v1994, %v1996
        %v1998 = vrot.slane %v1938, 4
        %v1999 = vrot.slane %v1939, 4
        %v2000 = vsel %vm595, %v1998, %v1999
        %v2001 = vrot.slane %v1940, 4
        %v2002 = vsel %vm595, %v1999, %v2001
        %v2003 = vrot.slane %v1941, 4
        %v2004 = vrot.slane %v1942, 4
        %v2005 = vsel %vm595, %v2003, %v2004
        %v2006 = vrot.slane %v1943, 4
        %v2007 = vsel %vm595, %v2004, %v2006
        %v2024 = vadd.f32 %v1904, %v1970
        %v2025 = vadd.f32 %v1905, %v1972
        %v2026 = vadd.f32 %v1906, %v1975
        %v2027 = vadd.f32 %v1907, %v1977
        %v2028 = vadd.f32 %v1908, %v1980
        %v2029 = vadd.f32 %v1909, %v1982
        %v2030 = vadd.f32 %v1910, %v1985
        %v2031 = vadd.f32 %v1911, %v1987
        %v2032 = vadd.f32 %v1912, %v1990
        %v2033 = vadd.f32 %v1913, %v1992
        %v2034 = vadd.f32 %v1914, %v1995
        %v2035 = vadd.f32 %v1915, %v1997
        %v2036 = vadd.f32 %v1916, %v2000
        %v2037 = vadd.f32 %v1917, %v2002
        %v2038 = vadd.f32 %v1918, %v2005
        %v2039 = vadd.f32 %v1919, %v2007
        %s2040 = sadd.s32 %s355, 12
        %s2041 = smul.u32 %s2040, 24
        %s2042 = scalar_lea.vmem [#allocation2], %s2041
        %v2043 = vld [vmem:[%s2042] sm:$0xff]
        %v2044 = vld [vmem:[%s2042 + $0x8] sm:$0xff]
        %v2045 = vld [vmem:[%s2042 + $0x10] sm:$0xf]
        %v2046 = vld [vmem:[%s2042 + $0x18] sm:$0xff]
        %v2047 = vld [vmem:[%s2042 + $0x20] sm:$0xff]
        %v2048 = vld [vmem:[%s2042 + $0x28] sm:$0xf]
        %v2049 = vld [vmem:[%s2042 + $0x30] sm:$0xff]
        %v2050 = vld [vmem:[%s2042 + $0x38] sm:$0xff]
        %v2051 = vld [vmem:[%s2042 + $0x40] sm:$0xf]
        %v2052 = vld [vmem:[%s2042 + $0x48] sm:$0xff]
        %v2053 = vld [vmem:[%s2042 + $0x50] sm:$0xff]
        %v2054 = vld [vmem:[%s2042 + $0x58] sm:$0xf]
        %v2055 = vld [vmem:[%s2042 + $0x60] sm:$0xff]
        %v2056 = vld [vmem:[%s2042 + $0x68] sm:$0xff]
        %v2057 = vld [vmem:[%s2042 + $0x70] sm:$0xf]
        %v2058 = vld [vmem:[%s2042 + $0x78] sm:$0xff]
        %v2059 = vld [vmem:[%s2042 + $0x80] sm:$0xff]
        %v2060 = vld [vmem:[%s2042 + $0x88] sm:$0xf]
        %v2061 = vld [vmem:[%s2042 + $0x90] sm:$0xff]
        %v2062 = vld [vmem:[%s2042 + $0x98] sm:$0xff]
        %v2063 = vld [vmem:[%s2042 + $0xa0] sm:$0xf]
        %v2064 = vld [vmem:[%s2042 + $0xa8] sm:$0xff]
        %v2065 = vld [vmem:[%s2042 + $0xb0] sm:$0xff]
        %v2066 = vld [vmem:[%s2042 + $0xb8] sm:$0xf]
        %v2067 = vmul.f32 %v2043, %v1009
        %v2068 = vmul.f32 %v2044, %v1009
        %v2069 = vmul.f32 %v2046, %v1009
        %v2070 = vmul.f32 %v2047, %v1009
        %v2071 = vmul.f32 %v2049, %v1009
        %v2072 = vmul.f32 %v2050, %v1009
        %v2073 = vmul.f32 %v2052, %v1009
        %v2074 = vmul.f32 %v2053, %v1009
        %v2075 = vmul.f32 %v2055, %v1009
        %v2076 = vmul.f32 %v2056, %v1009
        %v2077 = vmul.f32 %v2058, %v1009
        %v2078 = vmul.f32 %v2059, %v1009
        %v2079 = vmul.f32 %v2061, %v1009
        %v2080 = vmul.f32 %v2062, %v1009
        %v2081 = vmul.f32 %v2064, %v1009
        %v2082 = vmul.f32 %v2065, %v1009
        %v2083 = vadd.f32 %v2024, %v2067
        %v2084 = vadd.f32 %v2025, %v2068
        %v2085 = vadd.f32 %v2026, %v2069
        %v2086 = vadd.f32 %v2027, %v2070
        %v2087 = vadd.f32 %v2028, %v2071
        %v2088 = vadd.f32 %v2029, %v2072
        %v2089 = vadd.f32 %v2030, %v2073
        %v2090 = vadd.f32 %v2031, %v2074
        %v2091 = vadd.f32 %v2032, %v2075
        %v2092 = vadd.f32 %v2033, %v2076
        %v2093 = vadd.f32 %v2034, %v2077
        %v2094 = vadd.f32 %v2035, %v2078
        %v2095 = vadd.f32 %v2036, %v2079
        %v2096 = vadd.f32 %v2037, %v2080
        %v2097 = vadd.f32 %v2038, %v2081
        %v2098 = vadd.f32 %v2039, %v2082
        %v2099 = vmul.f32 %v2043, %v1045
        %v2100 = vmul.f32 %v2044, %v1045
        %v2101 = vmul.f32 %v2045, %v1045
        %v2102 = vmul.f32 %v2046, %v1045
        %v2103 = vmul.f32 %v2047, %v1045
        %v2104 = vmul.f32 %v2048, %v1045
        %v2105 = vmul.f32 %v2049, %v1045
        %v2106 = vmul.f32 %v2050, %v1045
        %v2107 = vmul.f32 %v2051, %v1045
        %v2108 = vmul.f32 %v2052, %v1045
        %v2109 = vmul.f32 %v2053, %v1045
        %v2110 = vmul.f32 %v2054, %v1045
        %v2111 = vmul.f32 %v2055, %v1045
        %v2112 = vmul.f32 %v2056, %v1045
        %v2113 = vmul.f32 %v2057, %v1045
        %v2114 = vmul.f32 %v2058, %v1045
        %v2115 = vmul.f32 %v2059, %v1045
        %v2116 = vmul.f32 %v2060, %v1045
        %v2117 = vmul.f32 %v2061, %v1045
        %v2118 = vmul.f32 %v2062, %v1045
        %v2119 = vmul.f32 %v2063, %v1045
        %v2120 = vmul.f32 %v2064, %v1045
        %v2121 = vmul.f32 %v2065, %v1045
        %v2122 = vmul.f32 %v2066, %v1045
        %v2147 = vrot.slane %v2099, 2
        %v2148 = vrot.slane %v2100, 2
        %v2149 = vsel %vm470, %v2147, %v2148
        %v2150 = vrot.slane %v2101, 2
        %v2151 = vsel %vm470, %v2148, %v2150
        %v2152 = vrot.slane %v2102, 2
        %v2153 = vrot.slane %v2103, 2
        %v2154 = vsel %vm470, %v2152, %v2153
        %v2155 = vrot.slane %v2104, 2
        %v2156 = vsel %vm470, %v2153, %v2155
        %v2157 = vrot.slane %v2105, 2
        %v2158 = vrot.slane %v2106, 2
        %v2159 = vsel %vm470, %v2157, %v2158
        %v2160 = vrot.slane %v2107, 2
        %v2161 = vsel %vm470, %v2158, %v2160
        %v2162 = vrot.slane %v2108, 2
        %v2163 = vrot.slane %v2109, 2
        %v2164 = vsel %vm470, %v2162, %v2163
        %v2165 = vrot.slane %v2110, 2
        %v2166 = vsel %vm470, %v2163, %v2165
        %v2167 = vrot.slane %v2111, 2
        %v2168 = vrot.slane %v2112, 2
        %v2169 = vsel %vm470, %v2167, %v2168
        %v2170 = vrot.slane %v2113, 2
        %v2171 = vsel %vm470, %v2168, %v2170
        %v2172 = vrot.slane %v2114, 2
        %v2173 = vrot.slane %v2115, 2
        %v2174 = vsel %vm470, %v2172, %v2173
        %v2175 = vrot.slane %v2116, 2
        %v2176 = vsel %vm470, %v2173, %v2175
        %v2177 = vrot.slane %v2117, 2
        %v2178 = vrot.slane %v2118, 2
        %v2179 = vsel %vm470, %v2177, %v2178
        %v2180 = vrot.slane %v2119, 2
        %v2181 = vsel %vm470, %v2178, %v2180
        %v2182 = vrot.slane %v2120, 2
        %v2183 = vrot.slane %v2121, 2
        %v2184 = vsel %vm470, %v2182, %v2183
        %v2185 = vrot.slane %v2122, 2
        %v2186 = vsel %vm470, %v2183, %v2185
        %v2203 = vadd.f32 %v2083, %v2149
        %v2204 = vadd.f32 %v2084, %v2151
        %v2205 = vadd.f32 %v2085, %v2154
        %v2206 = vadd.f32 %v2086, %v2156
        %v2207 = vadd.f32 %v2087, %v2159
        %v2208 = vadd.f32 %v2088, %v2161
        %v2209 = vadd.f32 %v2089, %v2164
        %v2210 = vadd.f32 %v2090, %v2166
        %v2211 = vadd.f32 %v2091, %v2169
        %v2212 = vadd.f32 %v2092, %v2171
        %v2213 = vadd.f32 %v2093, %v2174
        %v2214 = vadd.f32 %v2094, %v2176
        %v2215 = vadd.f32 %v2095, %v2179
        %v2216 = vadd.f32 %v2096, %v2181
        %v2217 = vadd.f32 %v2097, %v2184
        %v2218 = vadd.f32 %v2098, %v2186
        %v2219 = vmul.f32 %v2043, %v1169
        %v2220 = vmul.f32 %v2044, %v1169
        %v2221 = vmul.f32 %v2045, %v1169
        %v2222 = vmul.f32 %v2046, %v1169
        %v2223 = vmul.f32 %v2047, %v1169
        %v2224 = vmul.f32 %v2048, %v1169
        %v2225 = vmul.f32 %v2049, %v1169
        %v2226 = vmul.f32 %v2050, %v1169
        %v2227 = vmul.f32 %v2051, %v1169
        %v2228 = vmul.f32 %v2052, %v1169
        %v2229 = vmul.f32 %v2053, %v1169
        %v2230 = vmul.f32 %v2054, %v1169
        %v2231 = vmul.f32 %v2055, %v1169
        %v2232 = vmul.f32 %v2056, %v1169
        %v2233 = vmul.f32 %v2057, %v1169
        %v2234 = vmul.f32 %v2058, %v1169
        %v2235 = vmul.f32 %v2059, %v1169
        %v2236 = vmul.f32 %v2060, %v1169
        %v2237 = vmul.f32 %v2061, %v1169
        %v2238 = vmul.f32 %v2062, %v1169
        %v2239 = vmul.f32 %v2063, %v1169
        %v2240 = vmul.f32 %v2064, %v1169
        %v2241 = vmul.f32 %v2065, %v1169
        %v2242 = vmul.f32 %v2066, %v1169
        %v2267 = vrot.slane %v2219, 4
        %v2268 = vrot.slane %v2220, 4
        %v2269 = vsel %vm595, %v2267, %v2268
        %v2270 = vrot.slane %v2221, 4
        %v2271 = vsel %vm595, %v2268, %v2270
        %v2272 = vrot.slane %v2222, 4
        %v2273 = vrot.slane %v2223, 4
        %v2274 = vsel %vm595, %v2272, %v2273
        %v2275 = vrot.slane %v2224, 4
        %v2276 = vsel %vm595, %v2273, %v2275
        %v2277 = vrot.slane %v2225, 4
        %v2278 = vrot.slane %v2226, 4
        %v2279 = vsel %vm595, %v2277, %v2278
        %v2280 = vrot.slane %v2227, 4
        %v2281 = vsel %vm595, %v2278, %v2280
        %v2282 = vrot.slane %v2228, 4
        %v2283 = vrot.slane %v2229, 4
        %v2284 = vsel %vm595, %v2282, %v2283
        %v2285 = vrot.slane %v2230, 4
        %v2286 = vsel %vm595, %v2283, %v2285
        %v2287 = vrot.slane %v2231, 4
        %v2288 = vrot.slane %v2232, 4
        %v2289 = vsel %vm595, %v2287, %v2288
        %v2290 = vrot.slane %v2233, 4
        %v2291 = vsel %vm595, %v2288, %v2290
        %v2292 = vrot.slane %v2234, 4
        %v2293 = vrot.slane %v2235, 4
        %v2294 = vsel %vm595, %v2292, %v2293
        %v2295 = vrot.slane %v2236, 4
        %v2296 = vsel %vm595, %v2293, %v2295
        %v2297 = vrot.slane %v2237, 4
        %v2298 = vrot.slane %v2238, 4
        %v2299 = vsel %vm595, %v2297, %v2298
        %v2300 = vrot.slane %v2239, 4
        %v2301 = vsel %vm595, %v2298, %v2300
        %v2302 = vrot.slane %v2240, 4
        %v2303 = vrot.slane %v2241, 4
        %v2304 = vsel %vm595, %v2302, %v2303
        %v2305 = vrot.slane %v2242, 4
        %v2306 = vsel %vm595, %v2303, %v2305
        %v2323 = vadd.f32 %v2203, %v2269
        %v2324 = vadd.f32 %v2204, %v2271
        %v2325 = vadd.f32 %v2205, %v2274
        %v2326 = vadd.f32 %v2206, %v2276
        %v2327 = vadd.f32 %v2207, %v2279
        %v2328 = vadd.f32 %v2208, %v2281
        %v2329 = vadd.f32 %v2209, %v2284
        %v2330 = vadd.f32 %v2210, %v2286
        %v2331 = vadd.f32 %v2211, %v2289
        %v2332 = vadd.f32 %v2212, %v2291
        %v2333 = vadd.f32 %v2213, %v2294
        %v2334 = vadd.f32 %v2214, %v2296
        %v2335 = vadd.f32 %v2215, %v2299
        %v2336 = vadd.f32 %v2216, %v2301
        %v2337 = vadd.f32 %v2217, %v2304
        %v2338 = vadd.f32 %v2218, %v2306
        %v2339 = vpack.c.bf16 %v2324, %v2323
        %v2340 = vpack.c.bf16 %v2326, %v2325
        %v2341 = vpack.c.bf16 %v2328, %v2327
        %v2342 = vpack.c.bf16 %v2330, %v2329
        %v2343 = vpack.c.bf16 %v2332, %v2331
        %v2344 = vpack.c.bf16 %v2334, %v2333
        %v2345 = vpack.c.bf16 %v2336, %v2335
        %v2346 = vpack.c.bf16 %v2338, %v2337
        %v2348 = vsel %vm1304, %v2339, 0
        %v2351 = vsel %vm1304, %v2340, 0
        %v2354 = vsel %vm1304, %v2341, 0
        %v2357 = vsel %vm1304, %v2342, 0
        %v2360 = vsel %vm1304, %v2343, 0
        %v2363 = vsel %vm1304, %v2344, 0
        %v2366 = vsel %vm1304, %v2345, 0
        %v2369 = vsel %vm1304, %v2346, 0
        %2371 = vmatprep.subr.bf16.mxu0 0
        %2372 = vmatpush1.bf16.msra.mxu0 0
        %2373 = vmatprep.subr.bf16.mxu0 0
        %2374 = vmatpush1.bf16.msra.mxu0 0
        %2375 = vmatprep.subr.bf16.mxu0 0
        %2376 = vmatpush1.bf16.msra.mxu0 0
        %2377 = vmatprep.subr.bf16.mxu0 0
        %2378 = vmatpush1.bf16.msra.mxu0 0
        %2379 = vmatprep.subr.bf16.mxu0 0
        %2380 = vmatpush1.bf16.msra.mxu0 0
        %2381 = vmatprep.subr.bf16.mxu0 0
        %2382 = vmatpush1.bf16.msra.mxu0 0
        %2383 = vmatprep.subr.bf16.mxu0 0
        %2384 = vmatpush1.bf16.msra.mxu0 0
        %2385 = vmatprep.subr.bf16.mxu0 0
        %2386 = vmatpush1.bf16.msra.mxu0 %v1302
        %2387 = vmatprep.subr.bf16.mxu0 0
        %2388 = vmatpush2.bf16.msra.mxu0 0
        %2389 = vmatprep.subr.bf16.mxu0 0
        %2390 = vmatpush2.bf16.msra.mxu0 0
        %2391 = vmatprep.subr.bf16.mxu0 0
        %2392 = vmatpush2.bf16.msra.mxu0 0
        %2393 = vmatprep.subr.bf16.mxu0 0
        %2394 = vmatpush2.bf16.msra.mxu0 0
        %2395 = vmatprep.subr.bf16.mxu0 0
        %2396 = vmatpush2.bf16.msra.mxu0 0
        %2397 = vmatprep.subr.bf16.mxu0 0
        %2398 = vmatpush2.bf16.msra.mxu0 0
        %2399 = vmatprep.subr.bf16.mxu0 0
        %2400 = vmatpush2.bf16.msra.mxu0 0
        %2401 = vmatprep.subr.bf16.mxu0 0
        %2402 = vmatpush2.bf16.msra.mxu0 0
        %2403 = vmatprep.mubr.bf16.mxu0 0
        %2404 = vmatmul.mubr.bf16.gmra.mxu0 %v2348
        %v2405 = vpop.f32.mrf.mxu0
        %v2406 = vadd.f32 0.0, %v2405
        %v2407 = vpop.f32.mrf.mxu0
        %v2408 = vpop.f32.mrf.mxu0
        %v2409 = vadd.f32 0.0, %v2408
        %v2410 = vpop.f32.mrf.mxu0
        %2411 = vmatprep.mubr.bf16.mxu0 0
        %2412 = vmatmul.mubr.bf16.gmra.mxu0 %v2351
        %v2413 = vpop.f32.mrf.mxu0
        %v2414 = vadd.f32 0.0, %v2413
        %v2415 = vpop.f32.mrf.mxu0
        %v2416 = vpop.f32.mrf.mxu0
        %v2417 = vadd.f32 0.0, %v2416
        %v2418 = vpop.f32.mrf.mxu0
        %2419 = vmatprep.mubr.bf16.mxu0 0
        %2420 = vmatmul.mubr.bf16.gmra.mxu0 %v2354
        %v2421 = vpop.f32.mrf.mxu0
        %v2422 = vadd.f32 0.0, %v2421
        %v2423 = vpop.f32.mrf.mxu0
        %v2424 = vpop.f32.mrf.mxu0
        %v2425 = vadd.f32 0.0, %v2424
        %v2426 = vpop.f32.mrf.mxu0
        %2427 = vmatprep.mubr.bf16.mxu0 0
        %2428 = vmatmul.mubr.bf16.gmra.mxu0 %v2357
        %v2429 = vpop.f32.mrf.mxu0
        %v2430 = vadd.f32 0.0, %v2429
        %v2431 = vpop.f32.mrf.mxu0
        %v2432 = vpop.f32.mrf.mxu0
        %v2433 = vadd.f32 0.0, %v2432
        %v2434 = vpop.f32.mrf.mxu0
        %2435 = vmatprep.mubr.bf16.mxu0 0
        %2436 = vmatmul.mubr.bf16.gmra.mxu0 %v2360
        %v2437 = vpop.f32.mrf.mxu0
        %v2438 = vadd.f32 0.0, %v2437
        %v2439 = vpop.f32.mrf.mxu0
        %v2440 = vpop.f32.mrf.mxu0
        %v2441 = vadd.f32 0.0, %v2440
        %v2442 = vpop.f32.mrf.mxu0
        %2443 = vmatprep.mubr.bf16.mxu0 0
        %2444 = vmatmul.mubr.bf16.gmra.mxu0 %v2363
        %v2445 = vpop.f32.mrf.mxu0
        %v2446 = vadd.f32 0.0, %v2445
        %v2447 = vpop.f32.mrf.mxu0
        %v2448 = vpop.f32.mrf.mxu0
        %v2449 = vadd.f32 0.0, %v2448
        %v2450 = vpop.f32.mrf.mxu0
        %2451 = vmatprep.mubr.bf16.mxu0 0
        %2452 = vmatmul.mubr.bf16.gmra.mxu0 %v2366
        %v2453 = vpop.f32.mrf.mxu0
        %v2454 = vadd.f32 0.0, %v2453
        %v2455 = vpop.f32.mrf.mxu0
        %v2456 = vpop.f32.mrf.mxu0
        %v2457 = vadd.f32 0.0, %v2456
        %v2458 = vpop.f32.mrf.mxu0
        %2459 = vmatprep.mubr.bf16.mxu0 0
        %2460 = vmatmul.mubr.bf16.gmra.mxu0 %v2369
        %v2461 = vpop.f32.mrf.mxu0
        %v2462 = vadd.f32 0.0, %v2461
        %v2463 = vpop.f32.mrf.mxu0
        %v2464 = vpop.f32.mrf.mxu0
        %v2465 = vadd.f32 0.0, %v2464
        %v2466 = vpop.f32.mrf.mxu0
        %2467 = vdwg.mxu0
        %s2468 = scalar_lea.vmem %s231, 128 [#allocation9]
        %2469 = vst [vmem:[%s2468] sm:$0xff] %v2406
        %2470 = vst [vmem:[%s2468 + $0x8] sm:$0xff] %v2409
        %2471 = vst [vmem:[%s2468 + $0x10] sm:$0xff] %v2414
        %2472 = vst [vmem:[%s2468 + $0x18] sm:$0xff] %v2417
        %2473 = vst [vmem:[%s2468 + $0x20] sm:$0xff] %v2422
        %2474 = vst [vmem:[%s2468 + $0x28] sm:$0xff] %v2425
        %2475 = vst [vmem:[%s2468 + $0x30] sm:$0xff] %v2430
        %2476 = vst [vmem:[%s2468 + $0x38] sm:$0xff] %v2433
        %2477 = vst [vmem:[%s2468 + $0x40] sm:$0xff] %v2438
        %2478 = vst [vmem:[%s2468 + $0x48] sm:$0xff] %v2441
        %2479 = vst [vmem:[%s2468 + $0x50] sm:$0xff] %v2446
        %2480 = vst [vmem:[%s2468 + $0x58] sm:$0xff] %v2449
        %2481 = vst [vmem:[%s2468 + $0x60] sm:$0xff] %v2454
        %2482 = vst [vmem:[%s2468 + $0x68] sm:$0xff] %v2457
        %2483 = vst [vmem:[%s2468 + $0x70] sm:$0xff] %v2462
        %2484 = vst [vmem:[%s2468 + $0x78] sm:$0xff] %v2465
        %s2485 = sand.u32 %s111, 1
        %s2486 = scalar_lea.sflag [#allocation5], %s2485
        %s2487 = sand.u32 %s111, 1
        %s2488 = smul.addr %s2487, 256
        %s2489 = scalar_lea.vmem [#allocation9], %s2488
        // Predicated region
        $region49: #{tpu_custom_call.1} parent=31 // pred_check
          %p2490 = pneg %p121
        $region50: #{tpu_custom_call.1} parent=31 // pred_check_branch
          %2492 = sbr.rel (%p2490) target = $region52
        $region51: #{tpu_custom_call.1} parent=31 // pred_region
          %s2493 = smul.u32 16, %s26
          %s2495 = ssub.s32 4096, 4096
          %2496 = vsyncadd %s2486, %s2495
          %s2497 = smul.addr %s2493, 2
          %s2498 = smul.addr %s25, 32
          %s2499 = sadd.s32 %s2497, %s2498
          %s2500 = smul.addr %s2499, 128
          %s2501 = scalar_lea.hbm %s3, %s2500
          %s2502 = sshll.u32 %s2489, 4
          %s2503 = int_to_ptr.vmem [resolvable:$true] %s2502
          %2508 = dma.vmem_to_hbm [thread:$0]  %s2503, 4096, %s2501, %s2486, 128, 128, 8
        $region52: #{tpu_custom_call.1} parent=31 // pred_fallthru
          _
      $region32: #{tpu_custom_call.1} parent=5 // pred_fallthru
        _
      %p2509 = scmp.le.s32.totalorder 2, %s16
      // Predicated region
      $region53: #{tpu_custom_call.1} parent=5 // pred_check
        %p2510 = pneg %p2509
      $region54: #{tpu_custom_call.1} parent=5 // pred_check_branch
        %2512 = sbr.rel (%p2510) target = $region56
      $region55: #{tpu_custom_call.1} parent=5 // pred_region
        %s2513 = ssub.s32 %s16, 2
        // Predicated region
        $region57: #{tpu_custom_call.1} parent=55 // pred_check
          %p2514 = pneg %p127
        $region58: #{tpu_custom_call.1} parent=55 // pred_check_branch
          %2516 = sbr.rel (%p2514) target = $region60
        $region59: #{tpu_custom_call.1} parent=55 // pred_region
          %s2517 = sand.u32 %s112, 1
          %s2518 = scalar_lea.sflag [#allocation5], %s2517
          %s2519 = sand.u32 %s112, 1
          %s2520 = smul.addr %s2519, 256
          %s2521 = scalar_lea.vmem [#allocation9], %s2520
          %2522 = dma.done %s2518, 4096
        $region60: #{tpu_custom_call.1} parent=55 // pred_fallthru
          _
      $region56: #{tpu_custom_call.1} parent=5 // pred_fallthru
        _
    $region6: #{tpu_custom_call.1} parent=1 // loop_footer
      %s20 = sadd.s32 1, %s16
    $region7: #{tpu_custom_call.1} parent=1 // loop_footer_branch
      %15 = sbr.rel target = $region3
    $region8: #{tpu_custom_call.1} parent=1 // loop_exit
      _
    %2523 = vsyncpa [#allocation4], 1
    %s2524 = scalar_lea.sflag [#allocation4], 1
    %2525 = vsyncpa %s2524, 1
    %2526 = vsyncpa [#allocation7], 1
    %2527 = vsyncpa [#allocation5], 1
    %s2528 = scalar_lea.sflag [#allocation5], 1
    %2529 = vsyncpa %s2528, 1

</llo_original>
